<compile_context>
chip_gen: v7x
topology: tpu7x:2x2x1
jax: 0.10.0
libtpu: 0.0.40
codegen_flags: <defaults>
</compile_context>

<pallas_src>
import functools

import jax
import jax.numpy as jnp
from jax.experimental import pallas as pl
from jax.experimental.pallas import tpu as pltpu


# ---------------------------------------------------------------------------
# Per-generation VMEM budgeting (review items 1/2/7).
# ---------------------------------------------------------------------------
def _vmem_capacity_bytes():
    try:
        cap = int(pltpu.get_tpu_info().vmem_capacity_bytes)
        if cap > 0:
            return cap
    except Exception:
        pass
    return 64 * 1024 * 1024  # conservative (v7x-sized) fallback


_VMEM_CAPACITY = _vmem_capacity_bytes()
# ~25% headroom for compiler-internal scratch; 48 MiB on a 64 MiB v7x part,
# 96 MiB on 128 MiB v5e/v6e parts.
_VMEM_LIMIT = max(32 * 1024 * 1024, (_VMEM_CAPACITY * 3) // 4)
_VMEM_TILE_BUDGET = (_VMEM_LIMIT * 9) // 10


def _compiler_params(semantics):
    return pltpu.CompilerParams(dimension_semantics=semantics,
                                vmem_limit_bytes=_VMEM_LIMIT)


def _pick_tile(dim, preferred, align):
    """Largest tile <= preferred that divides dim and is a multiple of align;
    falls back to the full dim (a full-extent block is always legal)."""
    if dim <= preferred:
        return dim
    t = (preferred // align) * align
    while t >= align:
        if dim % t == 0:
            return t
        t -= align
    return dim


def _shrink(dim, tile, align):
    """Halve tile if the result stays an `align`-aligned divisor of dim."""
    half = tile // 2
    if half >= align and half % align == 0 and dim % half == 0:
        return half
    return tile


def _split_for_megacore(dim, tile, other_parallel, align):
    """v7x: keep >= 2 parallel grid steps so both TensorCores get work."""
    if other_parallel * (dim // tile) >= 2:
        return tile
    return _shrink(dim, tile, align)


def _proj_tiles(L, D, itemsize, n_fused):
    tm = _pick_tile(L, 1024, 128)   # tm is also the lane dim of the K^T output
    tk = _pick_tile(D, 512, 128)

    def footprint(tm_, tk_):
        io_elems = n_fused * (tm_ * tk_ + tk_ * D + tm_ * D)
        return 2 * io_elems * itemsize + n_fused * tm_ * D * 4  # dbl-buf + f32 acc

    while footprint(tm, tk) > _VMEM_TILE_BUDGET:
        new_tm = _shrink(L, tm, 128)
        new_tk = tk if new_tm != tm else _shrink(D, tk, 128)
        if new_tm == tm and new_tk == tk:
            break
        tm, tk = new_tm, new_tk
    return tm, tk


# ---------------------------------------------------------------------------
# Kernel 1a: fused Q/K/V projection -> per-head layouts.
#   Q: (B, H, L, d_k)   K: (B, H, d_k, L)  (pre-transposed)   V: (B, H, L, d_v)
# ---------------------------------------------------------------------------
def _fused_qkv_kernel(q_ref, k_ref, v_ref, wq_ref, wk_ref, wv_ref,
                      qo_ref, kt_ref, vo_ref, accq_ref, acck_ref, accv_ref,
                      *, num_heads, d_k):
    l = pl.program_id(2)

    @pl.when(l == 0)
    def _():
        accq_ref[...] = jnp.zeros_like(accq_ref)
        acck_ref[...] = jnp.zeros_like(acck_ref)
        accv_ref[...] = jnp.zeros_like(accv_ref)

    accq_ref[...] += jnp.dot(q_ref[0], wq_ref[...], preferred_element_type=jnp.float32)
    acck_ref[...] += jnp.dot(k_ref[0], wk_ref[...], preferred_element_type=jnp.float32)
    accv_ref[...] += jnp.dot(v_ref[0], wv_ref[...], preferred_element_type=jnp.float32)

    @pl.when(l == pl.num_programs(2) - 1)
    def _():
        qa = accq_ref[...]
        ka = acck_ref[...]
        va = accv_ref[...]
        # Head split (and the single K transpose) happen ONCE here, at the
        # projection epilogue, instead of per SDPA grid step.
        for h in range(num_heads):
            sl = slice(h * d_k, (h + 1) * d_k)
            qo_ref[0, h] = qa[:, sl].astype(qo_ref.dtype)
            kt_ref[0, h] = ka[:, sl].T.astype(kt_ref.dtype)
            vo_ref[0, h] = va[:, sl].astype(vo_ref.dtype)


def fused_qkv_proj(q3, k3, v3, wq, wk, wv, num_heads):
    B, L, D = q3.shape
    d_k = D // num_heads
    itemsize = jnp.dtype(q3.dtype).itemsize
    tm, tk = _proj_tiles(L, D, itemsize, n_fused=3)
    tm = _split_for_megacore(L, tm, B, 128)
    grid = (B, L // tm, D // tk)

    x_spec = lambda: pl.BlockSpec((1, tm, tk), lambda b, i, l: (b, i, l))
    w_spec = lambda: pl.BlockSpec((tk, D), lambda b, i, l: (l, 0))
    kernel = functools.partial(_fused_qkv_kernel, num_heads=num_heads, d_k=d_k)
    return pl.pallas_call(
        kernel,
        out_shape=(jax.ShapeDtypeStruct((B, num_heads, L, d_k), q3.dtype),
                   jax.ShapeDtypeStruct((B, num_heads, d_k, L), q3.dtype),
                   jax.ShapeDtypeStruct((B, num_heads, L, d_k), q3.dtype)),
        grid=grid,
        in_specs=[x_spec(), x_spec(), x_spec(), w_spec(), w_spec(), w_spec()],
        out_specs=(
            pl.BlockSpec((1, num_heads, tm, d_k), lambda b, i, l: (b, 0, i, 0)),
            pl.BlockSpec((1, num_heads, d_k, tm), lambda b, i, l: (b, 0, 0, i)),
            pl.BlockSpec((1, num_heads, tm, d_k), lambda b, i, l: (b, 0, i, 0)),
        ),
        scratch_shapes=[pltpu.VMEM((tm, D), jnp.float32) for _ in range(3)],
        compiler_params=_compiler_params(("parallel", "parallel", "arbitrary")),
    )(q3, k3, v3, wq, wk, wv)


# ---------------------------------------------------------------------------
# Kernel 1b: single projection to per-head layout (fallback when the q and
# k/v sequence lengths differ, e.g. cross-attention).
# ---------------------------------------------------------------------------
def _proj_heads_kernel(x_ref, w_ref, o_ref, acc_ref, *, num_heads, d_k, transpose_out):
    l = pl.program_id(2)

    @pl.when(l == 0)
    def _():
        acc_ref[...] = jnp.zeros_like(acc_ref)

    acc_ref[...] += jnp.dot(x_ref[0], w_ref[...], preferred_element_type=jnp.float32)

    @pl.when(l == pl.num_programs(2) - 1)
    def _():
        a = acc_ref[...]
        for h in range(num_heads):
            chunk = a[:, h * d_k:(h + 1) * d_k]
            if transpose_out:
                o_ref[0, h] = chunk.T.astype(o_ref.dtype)
            else:
                o_ref[0, h] = chunk.astype(o_ref.dtype)


def proj_to_heads(x3, w, num_heads, transpose_out=False):
    B, L, D = x3.shape
    d_k = D // num_heads
    itemsize = jnp.dtype(x3.dtype).itemsize
    tm, tk = _proj_tiles(L, D, itemsize, n_fused=1)
    tm = _split_for_megacore(L, tm, B, 128)
    grid = (B, L // tm, D // tk)
    if transpose_out:
        out_shape = jax.ShapeDtypeStruct((B, num_heads, d_k, L), x3.dtype)
        out_spec = pl.BlockSpec((1, num_heads, d_k, tm), lambda b, i, l: (b, 0, 0, i))
    else:
        out_shape = jax.ShapeDtypeStruct((B, num_heads, L, d_k), x3.dtype)
        out_spec = pl.BlockSpec((1, num_heads, tm, d_k), lambda b, i, l: (b, 0, i, 0))
    kernel = functools.partial(_proj_heads_kernel, num_heads=num_heads,
                               d_k=d_k, transpose_out=transpose_out)
    return pl.pallas_call(
        kernel,
        out_shape=out_shape,
        grid=grid,
        in_specs=[pl.BlockSpec((1, tm, tk), lambda b, i, l: (b, i, l)),
                  pl.BlockSpec((tk, D), lambda b, i, l: (l, 0))],
        out_specs=out_spec,
        scratch_shapes=[pltpu.VMEM((tm, D), jnp.float32)],
        compiler_params=_compiler_params(("parallel", "parallel", "arbitrary")),
    )(x3, w)


# ---------------------------------------------------------------------------
# Kernel 2: flash SDPA (online softmax).  Grid = (B, H, q-tiles, kv-tiles);
# per-head tiles arrive via DMA (no in-register head slicing), K is already
# transposed so QK^T is a plain matmul.  Outputs:
#   ctx  (B, H', Lq, d_v)  -- torch head/batch view quirk folded into out_spec
#   lse  (B, H,  Lq, 1)    -- per-row softmax stats (source order), for pass 2.
# ---------------------------------------------------------------------------
def _flash_kernel(q_ref, kt_ref, v_ref, ctx_ref, lse_ref, m_sc, l_sc, acc_sc, *, scale):
    kv_j = pl.program_id(3)

    @pl.when(kv_j == 0)
    def _():
        m_sc[...] = jnp.full_like(m_sc, -jnp.inf)
        l_sc[...] = jnp.zeros_like(l_sc)
        acc_sc[...] = jnp.zeros_like(acc_sc)

    q = q_ref[0, 0]        # (tq, d_k)
    kt = kt_ref[0, 0]      # (d_k, tkv)  pre-transposed K
    v = v_ref[0, 0]        # (tkv, d_v)

    s = jnp.dot(q, kt, preferred_element_type=jnp.float32) * scale       # (tq, tkv)
    m_prev = m_sc[...]
    m_new = jnp.maximum(m_prev, jnp.max(s, axis=-1, keepdims=True))
    alpha = jnp.exp(m_prev - m_new)
    p = jnp.exp(s - m_new)
    l_sc[...] = alpha * l_sc[...] + jnp.sum(p, axis=-1, keepdims=True)
    acc_sc[...] = alpha * acc_sc[...] + jnp.dot(p.astype(v.dtype), v,
                                                preferred_element_type=jnp.float32)
    m_sc[...] = m_new

    @pl.when(kv_j == pl.num_programs(3) - 1)
    def _():
        l_final = l_sc[...]
        # exact reciprocal (EUP) + broadcast multiply; keeps parity with the
        # exact-softmax reference while avoiding a full (tq, d_v) divide.
        ctx_ref[0, 0] = (acc_sc[...] * pl.reciprocal(l_final)).astype(ctx_ref.dtype)
        lse_ref[0, 0] = m_sc[...] + jnp.log(l_final)


def sdpa_flash(Qh, KhT, Vh):
    B, H, Lq, d_k = Qh.shape
    Lk = KhT.shape[3]
    d_v = Vh.shape[3]
    scale = 1.0 / (d_k ** 0.5)

    tq = _pick_tile(Lq, 256, 16 if Lq % 16 == 0 else 8)
    tq = _split_for_megacore(Lq, tq, B * H, 8)
    tkv = _pick_tile(Lk, 512, 128)          # lane axis of the score tile

    def ctx_map(b, h, i, j):
        n = h * B + b                        # torch flat (head, batch) index
        return (n // H, n % H, i, 0)         # -> destination (batch', head')

    kernel = functools.partial(_flash_kernel, scale=scale)
    ctx, lse = pl.pallas_call(
        kernel,
        out_shape=(jax.ShapeDtypeStruct((B, H, Lq, d_v), Qh.dtype),
                   jax.ShapeDtypeStruct((B, H, Lq, 1), jnp.float32)),
        grid=(B, H, Lq // tq, Lk // tkv),
        in_specs=[
            pl.BlockSpec((1, 1, tq, d_k), lambda b, h, i, j: (b, h, i, 0)),
            pl.BlockSpec((1, 1, d_k, tkv), lambda b, h, i, j: (b, h, 0, j)),
            pl.BlockSpec((1, 1, tkv, d_v), lambda b, h, i, j: (b, h, j, 0)),
        ],
        out_specs=(
            pl.BlockSpec((1, 1, tq, d_v), ctx_map),
            pl.BlockSpec((1, 1, tq, 1), lambda b, h, i, j: (b, h, i, 0)),
        ),
        scratch_shapes=[
            pltpu.VMEM((tq, 1), jnp.float32),
            pltpu.VMEM((tq, 1), jnp.float32),
            pltpu.VMEM((tq, d_v), jnp.float32),
        ],
        compiler_params=_compiler_params(
            ("parallel", "parallel", "parallel", "arbitrary")),
    )(Qh, KhT, Vh)
    return ctx, lse


# ---------------------------------------------------------------------------
# Kernel 2b: attention-weights writeback (pass 2).  Fully tiled over both q
# and kv, so its VMEM footprint is O(tq*tkv) regardless of sequence length.
# ---------------------------------------------------------------------------
def _attn_writeback_kernel(q_ref, kt_ref, lse_ref, attn_ref, *, scale):
    s = jnp.dot(q_ref[0, 0], kt_ref[0, 0], preferred_element_type=jnp.float32) * scale
    attn_ref[0, 0] = jnp.exp(s - lse_ref[0, 0]).astype(attn_ref.dtype)


def sdpa_attn_weights(Qh, KhT, lse, *, attn_dtype=jnp.float32):
    B, H, Lq, d_k = Qh.shape
    Lk = KhT.shape[3]
    scale = 1.0 / (d_k ** 0.5)
    tq = _pick_tile(Lq, 256, 8)
    tkv = _pick_tile(Lk, 512, 128)
    kernel = functools.partial(_attn_writeback_kernel, scale=scale)
    attn = pl.pallas_call(
        kernel,
        out_shape=jax.ShapeDtypeStruct((H, B, Lq, Lk), attn_dtype),
        grid=(B, H, Lq // tq, Lk // tkv),
        in_specs=[
            pl.BlockSpec((1, 1, tq, d_k), lambda b, h, i, j: (b, h, i, 0)),
            pl.BlockSpec((1, 1, d_k, tkv), lambda b, h, i, j: (b, h, 0, j)),
            pl.BlockSpec((1, 1, tq, 1), lambda b, h, i, j: (b, h, i, 0)),
        ],
        out_specs=pl.BlockSpec((1, 1, tq, tkv), lambda b, h, i, j: (h, b, i, j)),
        compiler_params=_compiler_params(("parallel",) * 4),
    )(Qh, KhT, lse)
    return attn.reshape(H * B, Lq, Lk)


# ---------------------------------------------------------------------------
# Kernel 3: output projection + residual + LayerNorm (eps=1e-6).
# Wo held resident (constant-index full block); ctx already in destination
# (batch', head') order so the per-head chunks line up with Wo row blocks.
# ---------------------------------------------------------------------------
def _out_ln_kernel(ctx_ref, wo_ref, res_ref, g_ref, bt_ref, o_ref, *,
                   num_heads, d_v, eps):
    tq = ctx_ref.shape[2]
    D = wo_ref.shape[1]
    acc = jnp.zeros((tq, D), jnp.float32)
    # TODO(synk): when d_v % 128 == 0 a single full-depth (tq, D) x (D, D)
    # contraction (ctx packed lane-dense by the SDPA out_spec) would use the
    # MXU better; per-head K=d_v contraction kept for generality (small d_v).
    for h in range(num_heads):
        acc = acc + jnp.dot(ctx_ref[0, h],
                            wo_ref[h * d_v:(h + 1) * d_v, :],   # sublane slice
                            preferred_element_type=jnp.float32)
    x = acc + res_ref[0].astype(jnp.float32)
    mean = jnp.mean(x, axis=-1, keepdims=True)
    var = jnp.mean(jnp.square(x - mean), axis=-1, keepdims=True)
    y = (x - mean) * jax.lax.rsqrt(var + eps)
    y = y * g_ref[...] + bt_ref[...]
    o_ref[0] = y.astype(o_ref.dtype)


def out_proj_residual_layernorm(ctx, wo, residual, gamma, beta, eps=1e-6):
    B, H, Lq, d_v = ctx.shape
    D = wo.shape[1]
    itemsize = jnp.dtype(ctx.dtype).itemsize
    tq = _pick_tile(Lq, 512, 8)

    def footprint(tq_):
        io = H * tq_ * d_v + D * D + 2 * tq_ * D
        return 2 * io * itemsize + 2 * tq_ * D * 4

    while footprint(tq) > _VMEM_TILE_BUDGET:
        new_tq = _shrink(Lq, tq, 8)
        if new_tq == tq:
            break
        tq = new_tq
    tq = _split_for_megacore(Lq, tq, B, 8)
    # TODO(synk): for D >= ~4096 on v7x, Wo should be column-blocked (with a
    # separate LayerNorm pass) instead of held fully resident.

    gamma2 = gamma.reshape(1, D).astype(jnp.float32)
    beta2 = beta.reshape(1, D).astype(jnp.float32)
    kernel = functools.partial(_out_ln_kernel, num_heads=H, d_v=d_v, eps=eps)
    return pl.pallas_call(
        kernel,
        out_shape=jax.ShapeDtypeStruct((B, Lq, D), residual.dtype),
        grid=(B, Lq // tq),
        in_specs=[
            pl.BlockSpec((1, H, tq, d_v), lambda b, i: (b, 0, i, 0)),
            pl.BlockSpec((D, D), lambda b, i: (0, 0)),          # Wo resident
            pl.BlockSpec((1, tq, D), lambda b, i: (b, i, 0)),
            pl.BlockSpec((1, D), lambda b, i: (0, 0)),
            pl.BlockSpec((1, D), lambda b, i: (0, 0)),
        ],
        out_specs=pl.BlockSpec((1, tq, D), lambda b, i: (b, i, 0)),
        compiler_params=_compiler_params(("parallel", "parallel")),
    )(ctx, wo, residual, gamma2, beta2)


# ---------------------------------------------------------------------------
# Full MultiHeadAttention forward (mask=None; dropout -> identity).
# ---------------------------------------------------------------------------
def multi_head_attention(q, k, v, params, num_heads, mask=None,
                         compute_dtype=jnp.bfloat16, return_attn=True,
                         attn_dtype=jnp.float32):
    # TODO(synk): optional attention mask is not plumbed into the kernels.
    assert mask is None, "mask is not supported by the Pallas kernels"
    # TODO(synk): training-mode dropout (p > 0) not implemented; identity (eval).
    B, Lq, D = q.shape
    _, Lk, _ = k.shape
    _, Lv, _ = v.shape
    assert D % num_heads == 0
    residual = q

    Wq = params["Wq"].astype(compute_dtype)
    Wk = params["Wk"].astype(compute_dtype)
    Wv = params["Wv"].astype(compute_dtype)
    Wo = params["Wo"].astype(compute_dtype)
    qc = q.astype(compute_dtype)
    kc = k.astype(compute_dtype)
    vc = v.astype(compute_dtype)

    if Lq == Lk == Lv:
        Qh, KhT, Vh = fused_qkv_proj(qc, kc, vc, Wq, Wk, Wv, num_heads)
    else:
        Qh = proj_to_heads(qc, Wq, num_heads, transpose_out=False)
        KhT = proj_to_heads(kc, Wk, num_heads, transpose_out=True)
        Vh = proj_to_heads(vc, Wv, num_heads, transpose_out=False)

    ctx, lse = sdpa_flash(Qh, KhT, Vh)
    attn = (sdpa_attn_weights(Qh, KhT, lse, attn_dtype=attn_dtype)
            if return_attn else None)

    output = out_proj_residual_layernorm(ctx, Wo, residual,
                                         params["gamma"], params["beta"])
    return output, attn


# ---------------------------------------------------------------------------
# Pure-JAX reference (faithful to the torch forward, incl. the view quirk).
# ---------------------------------------------------------------------------
def _mha_reference(q, k, v, params, num_heads):
    B, Lq, D = q.shape
    _, Lk, _ = k.shape
    _, Lv, _ = v.shape
    d_k = D // num_heads
    d_v = d_k
    Q = (q.reshape(B * Lq, D) @ params["Wq"]).reshape(B, Lq, num_heads, d_k)
    K = (k.reshape(B * Lk, D) @ params["Wk"]).reshape(B, Lk, num_heads, d_k)
    V = (v.reshape(B * Lv, D) @ params["Wv"]).reshape(B, Lv, num_heads, d_v)
    Q = jnp.transpose(Q, (2, 0, 1, 3)).reshape(B * num_heads, Lq, d_k)
    K = jnp.transpose(K, (2, 0, 1, 3)).reshape(B * num_heads, Lk, d_k)
    V = jnp.transpose(V, (2, 0, 1, 3)).reshape(B * num_heads, Lv, d_v)
    s = jnp.einsum("nqd,nkd->nqk", Q, K) / (d_k ** 0.5)
    attn = jax.nn.softmax(s, axis=-1)
    ctx = jnp.einsum("nqk,nkd->nqd", attn, V)
    ctx = ctx.reshape(B, num_heads, Lq, d_v)               # torch view quirk
    ctx = jnp.transpose(ctx, (0, 2, 1, 3)).reshape(B, Lq, num_heads * d_v)
    out = ctx @ params["Wo"] + q
    mean = out.mean(-1, keepdims=True)
    var = ((out - mean) ** 2).mean(-1, keepdims=True)
    out = (out - mean) / jnp.sqrt(var + 1e-6)
    out = out * params["gamma"] + params["beta"]
    return out, attn


def init_params(key, d_model):
    ks = jax.random.split(key, 4)
    scale = 1.0 / (d_model ** 0.5)
    # nn.Linear stores weight as (out,in) and computes x @ W.T; here we store
    # the already-transposed (in,out) matrix and compute x @ W directly.
    return {
        "Wq": jax.random.uniform(ks[0], (d_model, d_model), jnp.float32, -scale, scale),
        "Wk": jax.random.uniform(ks[1], (d_model, d_model), jnp.float32, -scale, scale),
        "Wv": jax.random.uniform(ks[2], (d_model, d_model), jnp.float32, -scale, scale),
        "Wo": jax.random.uniform(ks[3], (d_model, d_model), jnp.float32, -scale, scale),
        "gamma": jnp.ones((d_model,), jnp.float32),
        "beta": jnp.zeros((d_model,), jnp.float32),
    }


if __name__ == "__main__":
    d_model = 32
    num_heads = 4
    batch = 2
    seq = 8

    key = jax.random.PRNGKey(0)
    kq, kk, kv, kp = jax.random.split(key, 4)
    q = jax.random.normal(kq, (batch, seq, d_model), jnp.float32)
    k = jax.random.normal(kk, (batch, seq, d_model), jnp.float32)
    v = jax.random.normal(kv, (batch, seq, d_model), jnp.float32)
    params = init_params(kp, d_model)

    # 1) f32 compute path: matches the PyTorch forward numerics.
    out_f32, attn_f32 = multi_head_attention(q, k, v, params, num_heads,
                                             compute_dtype=jnp.float32)
    jax.block_until_ready((out_f32, attn_f32))
    out_ref, attn_ref = _mha_reference(q, k, v, params, num_heads)
    assert out_f32.shape == (batch, seq, d_model)
    assert attn_f32.shape == (batch * num_heads, seq, seq)
    assert jnp.allclose(out_f32, out_ref, atol=2e-3, rtol=2e-3)
    assert jnp.allclose(attn_f32, attn_ref, atol=2e-3, rtol=2e-3)

    # 2) bf16 MXU fast path (f32 accumulation, f32 softmax/LayerNorm stats).
    out_bf16, attn_bf16 = multi_head_attention(q, k, v, params, num_heads,
                                               compute_dtype=jnp.bfloat16)
    jax.block_until_ready((out_bf16, attn_bf16))
    assert out_bf16.shape == (batch, seq, d_model)
    assert attn_bf16.shape == (batch * num_heads, seq, seq)
    assert bool(jnp.all(jnp.isfinite(out_bf16)))
    assert bool(jnp.all(jnp.isfinite(attn_bf16)))

    # 3) no attention-matrix writeback (skips pass 2 entirely).
    out_noattn, attn_none = multi_head_attention(q, k, v, params, num_heads,
                                                 compute_dtype=jnp.bfloat16,
                                                 return_attn=False)
    jax.block_until_ready(out_noattn)
    assert attn_none is None
    assert out_noattn.shape == (batch, seq, d_model)
    assert jnp.allclose(out_noattn, out_bf16, atol=1e-3, rtol=1e-3)

    print("KERNEL_OK")
</pallas_src>

<mosaic_0001>
module attributes {stable_mosaic.version = 11 : i64} {
  func.func @_fused_qkv_kernel(%arg0: i32, %arg1: i32, %arg2: i32, %arg3: memref<1x8x32xf32, #tpu.memory_space<vmem>>, %arg4: memref<1x8x32xf32, #tpu.memory_space<vmem>>, %arg5: memref<1x8x32xf32, #tpu.memory_space<vmem>>, %arg6: memref<32x32xf32, #tpu.memory_space<vmem>>, %arg7: memref<32x32xf32, #tpu.memory_space<vmem>>, %arg8: memref<32x32xf32, #tpu.memory_space<vmem>>, %arg9: memref<1x4x8x8xf32, #tpu.memory_space<vmem>>, %arg10: memref<1x4x8x8xf32, #tpu.memory_space<vmem>>, %arg11: memref<1x4x8x8xf32, #tpu.memory_space<vmem>>, %arg12: memref<8x32xf32, #tpu.memory_space<vmem>>, %arg13: memref<8x32xf32, #tpu.memory_space<vmem>>, %arg14: memref<8x32xf32, #tpu.memory_space<vmem>>) attributes {dimension_semantics = [#tpu.dimension_semantics<parallel>, #tpu.dimension_semantics<parallel>, #tpu.dimension_semantics<arbitrary>], iteration_bounds = array<i64: 2, 1, 1>, scalar_prefetch = 0 : i64, scratch_operands = 3 : i64, tpu.core_type = #tpu.core_type<tc>, window_params = [{transform_indices = @transform_0, window_bounds = array<i64: 1, 8, 32>}, {transform_indices = @transform_1, window_bounds = array<i64: 1, 8, 32>}, {transform_indices = @transform_2, window_bounds = array<i64: 1, 8, 32>}, {transform_indices = @transform_3, window_bounds = array<i64: 32, 32>}, {transform_indices = @transform_4, window_bounds = array<i64: 32, 32>}, {transform_indices = @transform_5, window_bounds = array<i64: 32, 32>}, {transform_indices = @transform_6, window_bounds = array<i64: 1, 4, 8, 8>}, {transform_indices = @transform_7, window_bounds = array<i64: 1, 4, 8, 8>}, {transform_indices = @transform_8, window_bounds = array<i64: 1, 4, 8, 8>}]} {
    %c0_i32 = arith.constant 0 : i32
    %0 = arith.cmpi eq, %arg2, %c0_i32 : i32
    %1 = arith.extui %0 : i1 to i32
    %c0_i32_0 = arith.constant 0 : i32
    %2 = arith.cmpi ne, %1, %c0_i32_0 : i32
    scf.if %2 {
      %cst_31 = arith.constant 0.000000e+00 : f32
      %27 = vector.broadcast %cst_31 : f32 to vector<8x32xf32>
      %c0_32 = arith.constant 0 : index
      %c0_33 = arith.constant 0 : index
      %28 = vector.load %arg12[%c0_32, %c0_33] : memref<8x32xf32, #tpu.memory_space<vmem>>, vector<8x32xf32>
      tpu.vector_store %arg12[%c0_32, %c0_33], %27 {strides = array<i32>} : memref<8x32xf32, #tpu.memory_space<vmem>>, vector<8x32xf32>,
      %cst_34 = arith.constant 0.000000e+00 : f32
      %29 = vector.broadcast %cst_34 : f32 to vector<8x32xf32>
      %c0_35 = arith.constant 0 : index
      %c0_36 = arith.constant 0 : index
      %30 = vector.load %arg13[%c0_35, %c0_36] : memref<8x32xf32, #tpu.memory_space<vmem>>, vector<8x32xf32>
      tpu.vector_store %arg13[%c0_35, %c0_36], %29 {strides = array<i32>} : memref<8x32xf32, #tpu.memory_space<vmem>>, vector<8x32xf32>,
      %cst_37 = arith.constant 0.000000e+00 : f32
      %31 = vector.broadcast %cst_37 : f32 to vector<8x32xf32>
      %c0_38 = arith.constant 0 : index
      %c0_39 = arith.constant 0 : index
      %32 = vector.load %arg14[%c0_38, %c0_39] : memref<8x32xf32, #tpu.memory_space<vmem>>, vector<8x32xf32>
      tpu.vector_store %arg14[%c0_38, %c0_39], %31 {strides = array<i32>} : memref<8x32xf32, #tpu.memory_space<vmem>>, vector<8x32xf32>,
    } else {
    }
    %c0 = arith.constant 0 : index
    %c0_1 = arith.constant 0 : index
    %3 = vector.load %arg12[%c0, %c0_1] : memref<8x32xf32, #tpu.memory_space<vmem>>, vector<8x32xf32>
    %c0_2 = arith.constant 0 : index
    %c0_3 = arith.constant 0 : index
    %c0_4 = arith.constant 0 : index
    %4 = vector.load %arg3[%c0_2, %c0_3, %c0_4] : memref<1x8x32xf32, #tpu.memory_space<vmem>>, vector<1x8x32xf32>
    %5 = vector.shape_cast %4 : vector<1x8x32xf32> to vector<8x32xf32>
    %c0_5 = arith.constant 0 : index
    %c0_6 = arith.constant 0 : index
    %6 = vector.load %arg6[%c0_5, %c0_6] : memref<32x32xf32, #tpu.memory_space<vmem>>, vector<32x32xf32>
    %cst = arith.constant dense<0.000000e+00> : vector<8x32xf32>
    %7 = tpu.matmul %5, %6, %cst {dimension_numbers = #tpu.dot_dimension_numbers<[1], [0], [0], [1], [0, 0, 1, 1], [], []>} : vector<8x32xf32>, vector<32x32xf32>, vector<8x32xf32> -> vector<8x32xf32>
    %8 = arith.addf %3, %7 : vector<8x32xf32>
    %c0_7 = arith.constant 0 : index
    %c0_8 = arith.constant 0 : index
    %9 = vector.load %arg12[%c0_7, %c0_8] : memref<8x32xf32, #tpu.memory_space<vmem>>, vector<8x32xf32>
    tpu.vector_store %arg12[%c0_7, %c0_8], %8 {strides = array<i32>} : memref<8x32xf32, #tpu.memory_space<vmem>>, vector<8x32xf32>,
    %c0_9 = arith.constant 0 : index
    %c0_10 = arith.constant 0 : index
    %10 = vector.load %arg13[%c0_9, %c0_10] : memref<8x32xf32, #tpu.memory_space<vmem>>, vector<8x32xf32>
    %c0_11 = arith.constant 0 : index
    %c0_12 = arith.constant 0 : index
    %c0_13 = arith.constant 0 : index
    %11 = vector.load %arg4[%c0_11, %c0_12, %c0_13] : memref<1x8x32xf32, #tpu.memory_space<vmem>>, vector<1x8x32xf32>
    %12 = vector.shape_cast %11 : vector<1x8x32xf32> to vector<8x32xf32>
    %c0_14 = arith.constant 0 : index
    %c0_15 = arith.constant 0 : index
    %13 = vector.load %arg7[%c0_14, %c0_15] : memref<32x32xf32, #tpu.memory_space<vmem>>, vector<32x32xf32>
    %cst_16 = arith.constant dense<0.000000e+00> : vector<8x32xf32>
    %14 = tpu.matmul %12, %13, %cst_16 {dimension_numbers = #tpu.dot_dimension_numbers<[1], [0], [0], [1], [0, 0, 1, 1], [], []>} : vector<8x32xf32>, vector<32x32xf32>, vector<8x32xf32> -> vector<8x32xf32>
    %15 = arith.addf %10, %14 : vector<8x32xf32>
    %c0_17 = arith.constant 0 : index
    %c0_18 = arith.constant 0 : index
    %16 = vector.load %arg13[%c0_17, %c0_18] : memref<8x32xf32, #tpu.memory_space<vmem>>, vector<8x32xf32>
    tpu.vector_store %arg13[%c0_17, %c0_18], %15 {strides = array<i32>} : memref<8x32xf32, #tpu.memory_space<vmem>>, vector<8x32xf32>,
    %c0_19 = arith.constant 0 : index
    %c0_20 = arith.constant 0 : index
    %17 = vector.load %arg14[%c0_19, %c0_20] : memref<8x32xf32, #tpu.memory_space<vmem>>, vector<8x32xf32>
    %c0_21 = arith.constant 0 : index
    %c0_22 = arith.constant 0 : index
    %c0_23 = arith.constant 0 : index
    %18 = vector.load %arg5[%c0_21, %c0_22, %c0_23] : memref<1x8x32xf32, #tpu.memory_space<vmem>>, vector<1x8x32xf32>
    %19 = vector.shape_cast %18 : vector<1x8x32xf32> to vector<8x32xf32>
    %c0_24 = arith.constant 0 : index
    %c0_25 = arith.constant 0 : index
    %20 = vector.load %arg8[%c0_24, %c0_25] : memref<32x32xf32, #tpu.memory_space<vmem>>, vector<32x32xf32>
    %cst_26 = arith.constant dense<0.000000e+00> : vector<8x32xf32>
    %21 = tpu.matmul %19, %20, %cst_26 {dimension_numbers = #tpu.dot_dimension_numbers<[1], [0], [0], [1], [0, 0, 1, 1], [], []>} : vector<8x32xf32>, vector<32x32xf32>, vector<8x32xf32> -> vector<8x32xf32>
    %22 = arith.addf %17, %21 : vector<8x32xf32>
    %c0_27 = arith.constant 0 : index
    %c0_28 = arith.constant 0 : index
    %23 = vector.load %arg14[%c0_27, %c0_28] : memref<8x32xf32, #tpu.memory_space<vmem>>, vector<8x32xf32>
    tpu.vector_store %arg14[%c0_27, %c0_28], %22 {strides = array<i32>} : memref<8x32xf32, #tpu.memory_space<vmem>>, vector<8x32xf32>,
    %c0_i32_29 = arith.constant 0 : i32
    %24 = arith.cmpi eq, %arg2, %c0_i32_29 : i32
    %25 = arith.extui %24 : i1 to i32
    %c0_i32_30 = arith.constant 0 : i32
    %26 = arith.cmpi ne, %25, %c0_i32_30 : i32
    scf.if %26 {
      %c0_31 = arith.constant 0 : index
      %c0_32 = arith.constant 0 : index
      %27 = vector.load %arg12[%c0_31, %c0_32] : memref<8x32xf32, #tpu.memory_space<vmem>>, vector<8x32xf32>
      %c0_33 = arith.constant 0 : index
      %c0_34 = arith.constant 0 : index
      %28 = vector.load %arg13[%c0_33, %c0_34] : memref<8x32xf32, #tpu.memory_space<vmem>>, vector<8x32xf32>
      %c0_35 = arith.constant 0 : index
      %c0_36 = arith.constant 0 : index
      %29 = vector.load %arg14[%c0_35, %c0_36] : memref<8x32xf32, #tpu.memory_space<vmem>>, vector<8x32xf32>
      %30 = vector.extract_strided_slice %27 {offsets = [0, 0], sizes = [8, 8], strides = [1, 1]} : vector<8x32xf32> to vector<8x8xf32>
      %c0_37 = arith.constant 0 : index
      %c0_38 = arith.constant 0 : index
      %c0_39 = arith.constant 0 : index
      %c0_40 = arith.constant 0 : index
      %31 = vector.load %arg9[%c0_37, %c0_38, %c0_39, %c0_40] : memref<1x4x8x8xf32, #tpu.memory_space<vmem>>, vector<1x1x8x8xf32>
      %32 = vector.shape_cast %31 : vector<1x1x8x8xf32> to vector<8x8xf32>
      %33 = vector.shape_cast %30 : vector<8x8xf32> to vector<1x1x8x8xf32>
      tpu.vector_store %arg9[%c0_37, %c0_38, %c0_39, %c0_40], %33 {strides = array<i32>} : memref<1x4x8x8xf32, #tpu.memory_space<vmem>>, vector<1x1x8x8xf32>,
      %34 = vector.extract_strided_slice %28 {offsets = [0, 0], sizes = [8, 8], strides = [1, 1]} : vector<8x32xf32> to vector<8x8xf32>
      %35 = tpu.transpose %34, [1, 0] : vector<8x8xf32> -> vector<8x8xf32>
      %c0_41 = arith.constant 0 : index
      %c0_42 = arith.constant 0 : index
      %c0_43 = arith.constant 0 : index
      %c0_44 = arith.constant 0 : index
      %36 = vector.load %arg10[%c0_41, %c0_42, %c0_43, %c0_44] : memref<1x4x8x8xf32, #tpu.memory_space<vmem>>, vector<1x1x8x8xf32>
      %37 = vector.shape_cast %36 : vector<1x1x8x8xf32> to vector<8x8xf32>
      %38 = vector.shape_cast %35 : vector<8x8xf32> to vector<1x1x8x8xf32>
      tpu.vector_store %arg10[%c0_41, %c0_42, %c0_43, %c0_44], %38 {strides = array<i32>} : memref<1x4x8x8xf32, #tpu.memory_space<vmem>>, vector<1x1x8x8xf32>,
      %39 = vector.extract_strided_slice %29 {offsets = [0, 0], sizes = [8, 8], strides = [1, 1]} : vector<8x32xf32> to vector<8x8xf32>
      %c0_45 = arith.constant 0 : index
      %c0_46 = arith.constant 0 : index
      %c0_47 = arith.constant 0 : index
      %c0_48 = arith.constant 0 : index
      %40 = vector.load %arg11[%c0_45, %c0_46, %c0_47, %c0_48] : memref<1x4x8x8xf32, #tpu.memory_space<vmem>>, vector<1x1x8x8xf32>
      %41 = vector.shape_cast %40 : vector<1x1x8x8xf32> to vector<8x8xf32>
      %42 = vector.shape_cast %39 : vector<8x8xf32> to vector<1x1x8x8xf32>
      tpu.vector_store %arg11[%c0_45, %c0_46, %c0_47, %c0_48], %42 {strides = array<i32>} : memref<1x4x8x8xf32, #tpu.memory_space<vmem>>, vector<1x1x8x8xf32>,
      %43 = vector.extract_strided_slice %27 {offsets = [0, 8], sizes = [8, 8], strides = [1, 1]} : vector<8x32xf32> to vector<8x8xf32>
      %c0_49 = arith.constant 0 : index
      %c1 = arith.constant 1 : index
      %c0_50 = arith.constant 0 : index
      %c0_51 = arith.constant 0 : index
      %44 = vector.load %arg9[%c0_49, %c1, %c0_50, %c0_51] : memref<1x4x8x8xf32, #tpu.memory_space<vmem>>, vector<1x1x8x8xf32>
      %45 = vector.shape_cast %44 : vector<1x1x8x8xf32> to vector<8x8xf32>
      %46 = vector.shape_cast %43 : vector<8x8xf32> to vector<1x1x8x8xf32>
      tpu.vector_store %arg9[%c0_49, %c1, %c0_50, %c0_51], %46 {strides = array<i32>} : memref<1x4x8x8xf32, #tpu.memory_space<vmem>>, vector<1x1x8x8xf32>,
      %47 = vector.extract_strided_slice %28 {offsets = [0, 8], sizes = [8, 8], strides = [1, 1]} : vector<8x32xf32> to vector<8x8xf32>
      %48 = tpu.transpose %47, [1, 0] : vector<8x8xf32> -> vector<8x8xf32>
      %c0_52 = arith.constant 0 : index
      %c1_53 = arith.constant 1 : index
      %c0_54 = arith.constant 0 : index
      %c0_55 = arith.constant 0 : index
      %49 = vector.load %arg10[%c0_52, %c1_53, %c0_54, %c0_55] : memref<1x4x8x8xf32, #tpu.memory_space<vmem>>, vector<1x1x8x8xf32>
      %50 = vector.shape_cast %49 : vector<1x1x8x8xf32> to vector<8x8xf32>
      %51 = vector.shape_cast %48 : vector<8x8xf32> to vector<1x1x8x8xf32>
      tpu.vector_store %arg10[%c0_52, %c1_53, %c0_54, %c0_55], %51 {strides = array<i32>} : memref<1x4x8x8xf32, #tpu.memory_space<vmem>>, vector<1x1x8x8xf32>,
      %52 = vector.extract_strided_slice %29 {offsets = [0, 8], sizes = [8, 8], strides = [1, 1]} : vector<8x32xf32> to vector<8x8xf32>
      %c0_56 = arith.constant 0 : index
      %c1_57 = arith.constant 1 : index
      %c0_58 = arith.constant 0 : index
      %c0_59 = arith.constant 0 : index
      %53 = vector.load %arg11[%c0_56, %c1_57, %c0_58, %c0_59] : memref<1x4x8x8xf32, #tpu.memory_space<vmem>>, vector<1x1x8x8xf32>
      %54 = vector.shape_cast %53 : vector<1x1x8x8xf32> to vector<8x8xf32>
      %55 = vector.shape_cast %52 : vector<8x8xf32> to vector<1x1x8x8xf32>
      tpu.vector_store %arg11[%c0_56, %c1_57, %c0_58, %c0_59], %55 {strides = array<i32>} : memref<1x4x8x8xf32, #tpu.memory_space<vmem>>, vector<1x1x8x8xf32>,
      %56 = vector.extract_strided_slice %27 {offsets = [0, 16], sizes = [8, 8], strides = [1, 1]} : vector<8x32xf32> to vector<8x8xf32>
      %c0_60 = arith.constant 0 : index
      %c2 = arith.constant 2 : index
      %c0_61 = arith.constant 0 : index
      %c0_62 = arith.constant 0 : index
      %57 = vector.load %arg9[%c0_60, %c2, %c0_61, %c0_62] : memref<1x4x8x8xf32, #tpu.memory_space<vmem>>, vector<1x1x8x8xf32>
      %58 = vector.shape_cast %57 : vector<1x1x8x8xf32> to vector<8x8xf32>
      %59 = vector.shape_cast %56 : vector<8x8xf32> to vector<1x1x8x8xf32>
      tpu.vector_store %arg9[%c0_60, %c2, %c0_61, %c0_62], %59 {strides = array<i32>} : memref<1x4x8x8xf32, #tpu.memory_space<vmem>>, vector<1x1x8x8xf32>,
      %60 = vector.extract_strided_slice %28 {offsets = [0, 16], sizes = [8, 8], strides = [1, 1]} : vector<8x32xf32> to vector<8x8xf32>
      %61 = tpu.transpose %60, [1, 0] : vector<8x8xf32> -> vector<8x8xf32>
      %c0_63 = arith.constant 0 : index
      %c2_64 = arith.constant 2 : index
      %c0_65 = arith.constant 0 : index
      %c0_66 = arith.constant 0 : index
      %62 = vector.load %arg10[%c0_63, %c2_64, %c0_65, %c0_66] : memref<1x4x8x8xf32, #tpu.memory_space<vmem>>, vector<1x1x8x8xf32>
      %63 = vector.shape_cast %62 : vector<1x1x8x8xf32> to vector<8x8xf32>
      %64 = vector.shape_cast %61 : vector<8x8xf32> to vector<1x1x8x8xf32>
      tpu.vector_store %arg10[%c0_63, %c2_64, %c0_65, %c0_66], %64 {strides = array<i32>} : memref<1x4x8x8xf32, #tpu.memory_space<vmem>>, vector<1x1x8x8xf32>,
      %65 = vector.extract_strided_slice %29 {offsets = [0, 16], sizes = [8, 8], strides = [1, 1]} : vector<8x32xf32> to vector<8x8xf32>
      %c0_67 = arith.constant 0 : index
      %c2_68 = arith.constant 2 : index
      %c0_69 = arith.constant 0 : index
      %c0_70 = arith.constant 0 : index
      %66 = vector.load %arg11[%c0_67, %c2_68, %c0_69, %c0_70] : memref<1x4x8x8xf32, #tpu.memory_space<vmem>>, vector<1x1x8x8xf32>
      %67 = vector.shape_cast %66 : vector<1x1x8x8xf32> to vector<8x8xf32>
      %68 = vector.shape_cast %65 : vector<8x8xf32> to vector<1x1x8x8xf32>
      tpu.vector_store %arg11[%c0_67, %c2_68, %c0_69, %c0_70], %68 {strides = array<i32>} : memref<1x4x8x8xf32, #tpu.memory_space<vmem>>, vector<1x1x8x8xf32>,
      %69 = vector.extract_strided_slice %27 {offsets = [0, 24], sizes = [8, 8], strides = [1, 1]} : vector<8x32xf32> to vector<8x8xf32>
      %c0_71 = arith.constant 0 : index
      %c3 = arith.constant 3 : index
      %c0_72 = arith.constant 0 : index
      %c0_73 = arith.constant 0 : index
      %70 = vector.load %arg9[%c0_71, %c3, %c0_72, %c0_73] : memref<1x4x8x8xf32, #tpu.memory_space<vmem>>, vector<1x1x8x8xf32>
      %71 = vector.shape_cast %70 : vector<1x1x8x8xf32> to vector<8x8xf32>
      %72 = vector.shape_cast %69 : vector<8x8xf32> to vector<1x1x8x8xf32>
      tpu.vector_store %arg9[%c0_71, %c3, %c0_72, %c0_73], %72 {strides = array<i32>} : memref<1x4x8x8xf32, #tpu.memory_space<vmem>>, vector<1x1x8x8xf32>,
      %73 = vector.extract_strided_slice %28 {offsets = [0, 24], sizes = [8, 8], strides = [1, 1]} : vector<8x32xf32> to vector<8x8xf32>
      %74 = tpu.transpose %73, [1, 0] : vector<8x8xf32> -> vector<8x8xf32>
      %c0_74 = arith.constant 0 : index
      %c3_75 = arith.constant 3 : index
      %c0_76 = arith.constant 0 : index
      %c0_77 = arith.constant 0 : index
      %75 = vector.load %arg10[%c0_74, %c3_75, %c0_76, %c0_77] : memref<1x4x8x8xf32, #tpu.memory_space<vmem>>, vector<1x1x8x8xf32>
      %76 = vector.shape_cast %75 : vector<1x1x8x8xf32> to vector<8x8xf32>
      %77 = vector.shape_cast %74 : vector<8x8xf32> to vector<1x1x8x8xf32>
      tpu.vector_store %arg10[%c0_74, %c3_75, %c0_76, %c0_77], %77 {strides = array<i32>} : memref<1x4x8x8xf32, #tpu.memory_space<vmem>>, vector<1x1x8x8xf32>,
      %78 = vector.extract_strided_slice %29 {offsets = [0, 24], sizes = [8, 8], strides = [1, 1]} : vector<8x32xf32> to vector<8x8xf32>
      %c0_78 = arith.constant 0 : index
      %c3_79 = arith.constant 3 : index
      %c0_80 = arith.constant 0 : index
      %c0_81 = arith.constant 0 : index
      %79 = vector.load %arg11[%c0_78, %c3_79, %c0_80, %c0_81] : memref<1x4x8x8xf32, #tpu.memory_space<vmem>>, vector<1x1x8x8xf32>
      %80 = vector.shape_cast %79 : vector<1x1x8x8xf32> to vector<8x8xf32>
      %81 = vector.shape_cast %78 : vector<8x8xf32> to vector<1x1x8x8xf32>
      tpu.vector_store %arg11[%c0_78, %c3_79, %c0_80, %c0_81], %81 {strides = array<i32>} : memref<1x4x8x8xf32, #tpu.memory_space<vmem>>, vector<1x1x8x8xf32>,
    } else {
    }
    return
  }
  func.func @transform_0(%arg0: i32, %arg1: i32, %arg2: i32) -> (i32, i32, i32) {
    %c0_i32 = arith.constant 0 : i32
    return %arg0, %arg1, %arg2 : i32, i32, i32
  }
  func.func @transform_1(%arg0: i32, %arg1: i32, %arg2: i32) -> (i32, i32, i32) {
    %c0_i32 = arith.constant 0 : i32
    return %arg0, %arg1, %arg2 : i32, i32, i32
  }
  func.func @transform_2(%arg0: i32, %arg1: i32, %arg2: i32) -> (i32, i32, i32) {
    %c0_i32 = arith.constant 0 : i32
    return %arg0, %arg1, %arg2 : i32, i32, i32
  }
  func.func @transform_3(%arg0: i32, %arg1: i32, %arg2: i32) -> (i32, i32) {
    %c0_i32 = arith.constant 0 : i32
    %c0_i32_0 = arith.constant 0 : i32
    return %arg2, %c0_i32 : i32, i32
  }
  func.func @transform_4(%arg0: i32, %arg1: i32, %arg2: i32) -> (i32, i32) {
    %c0_i32 = arith.constant 0 : i32
    %c0_i32_0 = arith.constant 0 : i32
    return %arg2, %c0_i32 : i32, i32
  }
  func.func @transform_5(%arg0: i32, %arg1: i32, %arg2: i32) -> (i32, i32) {
    %c0_i32 = arith.constant 0 : i32
    %c0_i32_0 = arith.constant 0 : i32
    return %arg2, %c0_i32 : i32, i32
  }
  func.func @transform_6(%arg0: i32, %arg1: i32, %arg2: i32) -> (i32, i32, i32, i32) {
    %c0_i32 = arith.constant 0 : i32
    %c0_i32_0 = arith.constant 0 : i32
    %c0_i32_1 = arith.constant 0 : i32
    return %arg0, %c0_i32, %arg1, %c0_i32_0 : i32, i32, i32, i32
  }
  func.func @transform_7(%arg0: i32, %arg1: i32, %arg2: i32) -> (i32, i32, i32, i32) {
    %c0_i32 = arith.constant 0 : i32
    %c0_i32_0 = arith.constant 0 : i32
    %c0_i32_1 = arith.constant 0 : i32
    return %arg0, %c0_i32, %c0_i32_0, %arg1 : i32, i32, i32, i32
  }
  func.func @transform_8(%arg0: i32, %arg1: i32, %arg2: i32) -> (i32, i32, i32, i32) {
    %c0_i32 = arith.constant 0 : i32
    %c0_i32_0 = arith.constant 0 : i32
    %c0_i32_1 = arith.constant 0 : i32
    return %arg0, %c0_i32, %arg1, %c0_i32_0 : i32, i32, i32, i32
  }
}

</mosaic_0001>

<llo_original>
// kernel: tpu_custom_call.1
$region0: #{tpu_custom_call.1}
  #allocation0 [shape = 'u32[]', space=smem, size = 0x4, offset = 0x4, fixed_abs, tag = 'smem constant byte address 0x4 - core index']
  #allocation1 [shape = 'u32[144,128]{1,0:T(1,128)}', space=vmem, size = 0x12000, scoped, tag = 'internal scratch']
  #allocation2 [shape = 'f32[8,32]{1,0:T(8,128)}', space=vmem, size = 0x1000, scoped, tag = 'scratch operand']
  #allocation3 [shape = 'f32[8,32]{1,0:T(8,128)}', space=vmem, size = 0x1000, scoped, tag = 'scratch operand']
  #allocation4 [shape = 'f32[8,32]{1,0:T(8,128)}', space=vmem, size = 0x1000, scoped, tag = 'scratch operand']
  %s0 = inlined_call_operand.hbm [shape: f32[2,8,32], index: 0, kind: input, shape index: {}]
  %s1 = inlined_call_operand.hbm [shape: f32[2,8,32], index: 1, kind: input, shape index: {}]
  %s2 = inlined_call_operand.hbm [shape: f32[2,8,32], index: 2, kind: input, shape index: {}]
  %s3 = inlined_call_operand.hbm [shape: f32[32,32], index: 3, kind: input, shape index: {}]
  %s4 = inlined_call_operand.hbm [shape: f32[32,32], index: 4, kind: input, shape index: {}]
  %s5 = inlined_call_operand.hbm [shape: f32[32,32], index: 5, kind: input, shape index: {}]
  %s6 = inlined_call_operand.hbm [shape: f32[2,4,8,8], index: 6, kind: output, shape index: {0}]
  %s7 = inlined_call_operand.hbm [shape: f32[2,4,8,8], index: 7, kind: output, shape index: {1}]
  %s8 = inlined_call_operand.hbm [shape: f32[2,4,8,8], index: 8, kind: output, shape index: {2}]
  %9 = xla_tuple %s6, %s7, %s8
  %s10 = sld [smem:[#allocation0]]
  $region105: #{tpu_custom_call.1} parent=0
    _
  %s12 = ssub.s32 1, %s10
  %s13 = scalar_select 0, %s12, %s10
  $region1: #{tpu_custom_call.1} parent=0
    #allocation5 [shape = 'u8[8192]{0}', space=vmem, size = 0x2000, scoped, tag = 'input window, operand 0']
    #allocation6 [shape = 's32[2]{0}', space=sflag, size = 0x8, scoped, tag = 'scoped memory for tpu_custom_call.1']
    #allocation7 [shape = 's32[2]{0}', space=sflag, size = 0x8, scoped, tag = 'scoped memory for tpu_custom_call.1']
    #allocation8 [shape = 'u8[8192]{0}', space=vmem, size = 0x2000, scoped, tag = 'input window, operand 1']
    #allocation9 [shape = 's32[2]{0}', space=sflag, size = 0x8, scoped, tag = 'scoped memory for tpu_custom_call.1']
    #allocation10 [shape = 'u8[8192]{0}', space=vmem, size = 0x2000, scoped, tag = 'input window, operand 2']
    #allocation11 [shape = 'u8[16384]{0}', space=vmem, size = 0x4000, scoped, tag = 'input window, operand 3, single buffered']
    #allocation12 [shape = 's32[1]{0}', space=sflag, size = 0x4, scoped, tag = 'scoped memory for tpu_custom_call.1']
    #allocation13 [shape = 'u8[16384]{0}', space=vmem, size = 0x4000, scoped, tag = 'input window, operand 4, single buffered']
    #allocation14 [shape = 'u8[16384]{0}', space=vmem, size = 0x4000, scoped, tag = 'input window, operand 5, single buffered']
    #allocation15 [shape = 's32[1]{0}', space=sflag, size = 0x4, scoped, tag = 'scoped memory for tpu_custom_call.1']
    #allocation16 [shape = 'u8[32768]{0}', space=vmem, size = 0x8000, scoped, tag = 'output window, operand 0']
    #allocation17 [shape = 'u8[32768]{0}', space=vmem, size = 0x8000, scoped, tag = 'output window, operand 1']
    #allocation18 [shape = 's32[2]{0}', space=sflag, size = 0x8, scoped, tag = 'scoped memory for tpu_custom_call.1']
    #allocation19 [shape = 'u8[32768]{0}', space=vmem, size = 0x8000, scoped, tag = 'output window, operand 2']
    %14 = vsyncpa [#allocation6], 0
    %s15 = scalar_lea.sflag [#allocation6], 1
    %16 = vsyncpa %s15, 0
    %17 = vsyncpa [#allocation9], 0
    %s18 = scalar_lea.sflag [#allocation9], 1
    %19 = vsyncpa %s18, 0
    %20 = vsyncpa [#allocation12], 0
    %21 = vsyncpa [#allocation15], 0
    %22 = vsyncpa [#allocation7], 0
    %s23 = scalar_lea.sflag [#allocation7], 1
    %24 = vsyncpa %s23, 0
    %25 = vsyncpa [#allocation18], 0
    %s26 = scalar_lea.sflag [#allocation18], 1
    %27 = vsyncpa %s26, 0
    loop: start=0, step=1, limit=4
    $region2: #{tpu_custom_call.1} parent=1 // loop_pre_header
      _
    $region3: #{tpu_custom_call.1} parent=1 // loop_header
      %s29 = sphi 0, %s33
      %p30 = scmp.ge.s32.totalorder %s29, 4
      %s36 = sphi 0, %s55
      %s37 = sphi 0, %s51
      %s38 = sphi 0, %s47
      %s39 = sphi 0, %s36
      %s40 = sphi 0, %s37
      %s41 = sphi 0, %s38
      %s42 = sphi 0, %s39
      %s43 = sphi 0, %s40
      %s44 = sphi 0, %s41
      %s62 = sphi 0, %s64
      %s65 = sphi 0, %s62
      %s66 = sphi 0, %s65
      %s82 = sphi 0, %s66
      %s92 = sphi 0, %s94
      %s95 = sphi 0, %s92
      %s96 = sphi 0, %s95
      %s112 = sphi 0, %s96
      %s122 = sphi 0, %s124
      %s125 = sphi 0, %s122
      %s126 = sphi 0, %s125
      %s142 = sphi 0, %s126
      %s148 = sphi 0, %s150
      %s151 = sphi 0, %s148
      %s152 = sphi 0, %s151
      %s168 = sphi 0, %s152
      %s174 = sphi 0, %s176
      %s177 = sphi 0, %s174
      %s178 = sphi 0, %s177
      %s194 = sphi 0, %s178
      %s200 = sphi 0, %s202
      %s203 = sphi 0, %s200
      %s204 = sphi 0, %s203
      %s220 = sphi 0, %s204
      %s228 = sphi 0, %s230
      %s231 = sphi 0, %s228
      %s232 = sphi 0, %s231
      %s248 = sphi 0, %s232
      %s256 = sphi 0, %s258
      %s259 = sphi 0, %s256
      %s260 = sphi 0, %s259
      %s276 = sphi 0, %s260
      %s284 = sphi 0, %s286
      %s287 = sphi 0, %s284
      %s288 = sphi 0, %s287
      %s304 = sphi 0, %s288
    $region4: #{tpu_custom_call.1} parent=1 // loop_header_branch
      %32 = sbr.rel (%p30) target = $region8
    $region5: #{tpu_custom_call.1} parent=1 // loop_body
      %s34 = ssub.s32 %s29, 1
      %s35 = ssub.s32 %s29, 2
      %s45 = sadd.s32 1, %s38
      %p46 = scmp.ge.s32.totalorder %s45, 1
      %s47 = scalar_select %p46, 0, %s45
      %s48 = sadd.s32 1, %s37
      %s49 = scalar_select %p46, %s48, %s37
      %p50 = scmp.ge.s32.totalorder %s49, 1
      %s51 = scalar_select %p50, 0, %s49
      %s52 = sadd.s32 1, %s36
      %s53 = scalar_select %p50, %s52, %s36
      %p54 = scmp.ge.s32.totalorder %s53, 2
      %s55 = scalar_select %p54, 0, %s53
      %s56 = ssub.s32 %s36, %s55
      %s57 = ssub.s32 %s37, %s51
      %s58 = sor.u32 %s56, %s57
      %s59 = ssub.s32 %s38, %s47
      %s60 = sor.u32 %s58, %s59
      %p61 = scmp.eq.s32.totalorder %s60, 0
      %s63 = sadd.s32 %s62, 1
      %s64 = scalar_select %p61, %s62, %s63
      %p67 = pneg %p61
      %p68 = scmp.eq.s32.totalorder %s29, 1
      %p69 = por %p67, %p68
      %p70 = scmp.ne.s32.totalorder %s62, %s65
      %p71 = scmp.eq.s32.totalorder %s29, 0
      %p72 = por %p70, %p71
      %p73 = scmp.ne.s32.totalorder %s62, %s65
      %p74 = scmp.eq.s32.totalorder %s34, 1
      %p75 = por %p73, %p74
      %p76 = scmp.ne.s32.totalorder %s65, %s66
      %p77 = scmp.eq.s32.totalorder %s34, 0
      %p78 = por %p76, %p77
      %p79 = scmp.ne.s32.totalorder %s65, %s66
      %p80 = scmp.eq.s32.totalorder %s35, 1
      %p81 = por %p79, %p80
      %p83 = scmp.ne.s32.totalorder %s66, %s82
      %p84 = scmp.eq.s32.totalorder %s35, 0
      %p85 = por %p83, %p84
      %s86 = ssub.s32 %s36, %s55
      %s87 = ssub.s32 %s37, %s51
      %s88 = sor.u32 %s86, %s87
      %s89 = ssub.s32 %s38, %s47
      %s90 = sor.u32 %s88, %s89
      %p91 = scmp.eq.s32.totalorder %s90, 0
      %s93 = sadd.s32 %s92, 1
      %s94 = scalar_select %p91, %s92, %s93
      %p97 = pneg %p91
      %p98 = scmp.eq.s32.totalorder %s29, 1
      %p99 = por %p97, %p98
      %p100 = scmp.ne.s32.totalorder %s92, %s95
      %p101 = scmp.eq.s32.totalorder %s29, 0
      %p102 = por %p100, %p101
      %p103 = scmp.ne.s32.totalorder %s92, %s95
      %p104 = scmp.eq.s32.totalorder %s34, 1
      %p105 = por %p103, %p104
      %p106 = scmp.ne.s32.totalorder %s95, %s96
      %p107 = scmp.eq.s32.totalorder %s34, 0
      %p108 = por %p106, %p107
      %p109 = scmp.ne.s32.totalorder %s95, %s96
      %p110 = scmp.eq.s32.totalorder %s35, 1
      %p111 = por %p109, %p110
      %p113 = scmp.ne.s32.totalorder %s96, %s112
      %p114 = scmp.eq.s32.totalorder %s35, 0
      %p115 = por %p113, %p114
      %s116 = ssub.s32 %s36, %s55
      %s117 = ssub.s32 %s37, %s51
      %s118 = sor.u32 %s116, %s117
      %s119 = ssub.s32 %s38, %s47
      %s120 = sor.u32 %s118, %s119
      %p121 = scmp.eq.s32.totalorder %s120, 0
      %s123 = sadd.s32 %s122, 1
      %s124 = scalar_select %p121, %s122, %s123
      %p127 = pneg %p121
      %p128 = scmp.eq.s32.totalorder %s29, 1
      %p129 = por %p127, %p128
      %p130 = scmp.ne.s32.totalorder %s122, %s125
      %p131 = scmp.eq.s32.totalorder %s29, 0
      %p132 = por %p130, %p131
      %p133 = scmp.ne.s32.totalorder %s122, %s125
      %p134 = scmp.eq.s32.totalorder %s34, 1
      %p135 = por %p133, %p134
      %p136 = scmp.ne.s32.totalorder %s125, %s126
      %p137 = scmp.eq.s32.totalorder %s34, 0
      %p138 = por %p136, %p137
      %p139 = scmp.ne.s32.totalorder %s125, %s126
      %p140 = scmp.eq.s32.totalorder %s35, 1
      %p141 = por %p139, %p140
      %p143 = scmp.ne.s32.totalorder %s126, %s142
      %p144 = scmp.eq.s32.totalorder %s35, 0
      %p145 = por %p143, %p144
      %s146 = ssub.s32 %s38, %s47
      %p147 = scmp.eq.s32.totalorder %s146, 0
      %s149 = sadd.s32 %s148, 1
      %s150 = scalar_select %p147, %s148, %s149
      %p153 = pneg %p147
      %p154 = scmp.eq.s32.totalorder %s29, 1
      %p155 = por %p153, %p154
      %p156 = scmp.ne.s32.totalorder %s148, %s151
      %p157 = scmp.eq.s32.totalorder %s29, 0
      %p158 = por %p156, %p157
      %p159 = scmp.ne.s32.totalorder %s148, %s151
      %p160 = scmp.eq.s32.totalorder %s34, 1
      %p161 = por %p159, %p160
      %p162 = scmp.ne.s32.totalorder %s151, %s152
      %p163 = scmp.eq.s32.totalorder %s34, 0
      %p164 = por %p162, %p163
      %p165 = scmp.ne.s32.totalorder %s151, %s152
      %p166 = scmp.eq.s32.totalorder %s35, 1
      %p167 = por %p165, %p166
      %p169 = scmp.ne.s32.totalorder %s152, %s168
      %p170 = scmp.eq.s32.totalorder %s35, 0
      %p171 = por %p169, %p170
      %s172 = ssub.s32 %s38, %s47
      %p173 = scmp.eq.s32.totalorder %s172, 0
      %s175 = sadd.s32 %s174, 1
      %s176 = scalar_select %p173, %s174, %s175
      %p179 = pneg %p173
      %p180 = scmp.eq.s32.totalorder %s29, 1
      %p181 = por %p179, %p180
      %p182 = scmp.ne.s32.totalorder %s174, %s177
      %p183 = scmp.eq.s32.totalorder %s29, 0
      %p184 = por %p182, %p183
      %p185 = scmp.ne.s32.totalorder %s174, %s177
      %p186 = scmp.eq.s32.totalorder %s34, 1
      %p187 = por %p185, %p186
      %p188 = scmp.ne.s32.totalorder %s177, %s178
      %p189 = scmp.eq.s32.totalorder %s34, 0
      %p190 = por %p188, %p189
      %p191 = scmp.ne.s32.totalorder %s177, %s178
      %p192 = scmp.eq.s32.totalorder %s35, 1
      %p193 = por %p191, %p192
      %p195 = scmp.ne.s32.totalorder %s178, %s194
      %p196 = scmp.eq.s32.totalorder %s35, 0
      %p197 = por %p195, %p196
      %s198 = ssub.s32 %s38, %s47
      %p199 = scmp.eq.s32.totalorder %s198, 0
      %s201 = sadd.s32 %s200, 1
      %s202 = scalar_select %p199, %s200, %s201
      %p205 = pneg %p199
      %p206 = scmp.eq.s32.totalorder %s29, 1
      %p207 = por %p205, %p206
      %p208 = scmp.ne.s32.totalorder %s200, %s203
      %p209 = scmp.eq.s32.totalorder %s29, 0
      %p210 = por %p208, %p209
      %p211 = scmp.ne.s32.totalorder %s200, %s203
      %p212 = scmp.eq.s32.totalorder %s34, 1
      %p213 = por %p211, %p212
      %p214 = scmp.ne.s32.totalorder %s203, %s204
      %p215 = scmp.eq.s32.totalorder %s34, 0
      %p216 = por %p214, %p215
      %p217 = scmp.ne.s32.totalorder %s203, %s204
      %p218 = scmp.eq.s32.totalorder %s35, 1
      %p219 = por %p217, %p218
      %p221 = scmp.ne.s32.totalorder %s204, %s220
      %p222 = scmp.eq.s32.totalorder %s35, 0
      %p223 = por %p221, %p222
      %s224 = ssub.s32 %s36, %s55
      %s225 = ssub.s32 %s37, %s51
      %s226 = sor.u32 %s224, %s225
      %p227 = scmp.eq.s32.totalorder %s226, 0
      %s229 = sadd.s32 %s228, 1
      %s230 = scalar_select %p227, %s228, %s229
      %p233 = pneg %p227
      %p234 = scmp.eq.s32.totalorder %s29, 1
      %p235 = por %p233, %p234
      %p236 = scmp.ne.s32.totalorder %s228, %s231
      %p237 = scmp.eq.s32.totalorder %s29, 0
      %p238 = por %p236, %p237
      %p239 = scmp.ne.s32.totalorder %s228, %s231
      %p240 = scmp.eq.s32.totalorder %s34, 1
      %p241 = por %p239, %p240
      %p242 = scmp.ne.s32.totalorder %s231, %s232
      %p243 = scmp.eq.s32.totalorder %s34, 0
      %p244 = por %p242, %p243
      %p245 = scmp.ne.s32.totalorder %s231, %s232
      %p246 = scmp.eq.s32.totalorder %s35, 1
      %p247 = por %p245, %p246
      %p249 = scmp.ne.s32.totalorder %s232, %s248
      %p250 = scmp.eq.s32.totalorder %s35, 0
      %p251 = por %p249, %p250
      %s252 = ssub.s32 %s36, %s55
      %s253 = ssub.s32 %s37, %s51
      %s254 = sor.u32 %s252, %s253
      %p255 = scmp.eq.s32.totalorder %s254, 0
      %s257 = sadd.s32 %s256, 1
      %s258 = scalar_select %p255, %s256, %s257
      %p261 = pneg %p255
      %p262 = scmp.eq.s32.totalorder %s29, 1
      %p263 = por %p261, %p262
      %p264 = scmp.ne.s32.totalorder %s256, %s259
      %p265 = scmp.eq.s32.totalorder %s29, 0
      %p266 = por %p264, %p265
      %p267 = scmp.ne.s32.totalorder %s256, %s259
      %p268 = scmp.eq.s32.totalorder %s34, 1
      %p269 = por %p267, %p268
      %p270 = scmp.ne.s32.totalorder %s259, %s260
      %p271 = scmp.eq.s32.totalorder %s34, 0
      %p272 = por %p270, %p271
      %p273 = scmp.ne.s32.totalorder %s259, %s260
      %p274 = scmp.eq.s32.totalorder %s35, 1
      %p275 = por %p273, %p274
      %p277 = scmp.ne.s32.totalorder %s260, %s276
      %p278 = scmp.eq.s32.totalorder %s35, 0
      %p279 = por %p277, %p278
      %s280 = ssub.s32 %s36, %s55
      %s281 = ssub.s32 %s37, %s51
      %s282 = sor.u32 %s280, %s281
      %p283 = scmp.eq.s32.totalorder %s282, 0
      %s285 = sadd.s32 %s284, 1
      %s286 = scalar_select %p283, %s284, %s285
      %p289 = pneg %p283
      %p290 = scmp.eq.s32.totalorder %s29, 1
      %p291 = por %p289, %p290
      %p292 = scmp.ne.s32.totalorder %s284, %s287
      %p293 = scmp.eq.s32.totalorder %s29, 0
      %p294 = por %p292, %p293
      %p295 = scmp.ne.s32.totalorder %s284, %s287
      %p296 = scmp.eq.s32.totalorder %s34, 1
      %p297 = por %p295, %p296
      %p298 = scmp.ne.s32.totalorder %s287, %s288
      %p299 = scmp.eq.s32.totalorder %s34, 0
      %p300 = por %p298, %p299
      %p301 = scmp.ne.s32.totalorder %s287, %s288
      %p302 = scmp.eq.s32.totalorder %s35, 1
      %p303 = por %p301, %p302
      %p305 = scmp.ne.s32.totalorder %s288, %s304
      %p306 = scmp.eq.s32.totalorder %s35, 0
      %p307 = por %p305, %p306
      %p308 = scmp.le.s32.totalorder 1, %s29
      %p309 = scmp.lt.s32.totalorder %s29, 3
      %p310 = pnand %p308, %p309
      %p311 = pneg %p310
      // Predicated region
      $region9: #{tpu_custom_call.1} parent=5 // pred_check
        _
      $region10: #{tpu_custom_call.1} parent=5 // pred_check_branch
        %313 = sbr.rel (%p310) target = $region12
      $region11: #{tpu_custom_call.1} parent=5 // pred_region
        %s314 = ssub.s32 %s29, 1
        // Predicated region
        $region13: #{tpu_custom_call.1} parent=11 // pred_check
          %p315 = pneg %p164
        $region14: #{tpu_custom_call.1} parent=11 // pred_check_branch
          %317 = sbr.rel (%p315) target = $region16
        $region15: #{tpu_custom_call.1} parent=11 // pred_region
          %s318 = smul.u32 4, %s41
          %s320 = ssub.s32 512, 512
          %321 = vsyncadd [#allocation12], %s320
          %s322 = smul.addr %s318, 128
          %s323 = scalar_lea.hbm %s3, %s322
          %s324 = sshll.u32 [#allocation11], 4
          %s325 = int_to_ptr.vmem [resolvable:$true] %s324
          %330 = dma.hbm_to_vmem [thread:$0]  %s323, 512, %s325, [#allocation12], 128, 128, 8
        $region16: #{tpu_custom_call.1} parent=11 // pred_fallthru
          _
        // Predicated region
        $region17: #{tpu_custom_call.1} parent=11 // pred_check
          %p331 = pneg %p190
        $region18: #{tpu_custom_call.1} parent=11 // pred_check_branch
          %333 = sbr.rel (%p331) target = $region20
        $region19: #{tpu_custom_call.1} parent=11 // pred_region
          %s334 = smul.u32 4, %s41
          %s336 = ssub.s32 512, 512
          %337 = vsyncadd [#allocation12], %s336
          %s338 = smul.addr %s334, 128
          %s339 = scalar_lea.hbm %s4, %s338
          %s340 = sshll.u32 [#allocation13], 4
          %s341 = int_to_ptr.vmem [resolvable:$true] %s340
          %346 = dma.hbm_to_vmem [thread:$0]  %s339, 512, %s341, [#allocation12], 128, 128, 8
        $region20: #{tpu_custom_call.1} parent=11 // pred_fallthru
          _
        // Predicated region
        $region21: #{tpu_custom_call.1} parent=11 // pred_check
          %p347 = pneg %p216
        $region22: #{tpu_custom_call.1} parent=11 // pred_check_branch
          %349 = sbr.rel (%p347) target = $region24
        $region23: #{tpu_custom_call.1} parent=11 // pred_region
          %s350 = smul.u32 4, %s41
          %s352 = ssub.s32 512, 512
          %353 = vsyncadd [#allocation15], %s352
          %s354 = smul.addr %s350, 128
          %s355 = scalar_lea.hbm %s5, %s354
          %s356 = sshll.u32 [#allocation14], 4
          %s357 = int_to_ptr.vmem [resolvable:$true] %s356
          %362 = dma.hbm_to_vmem [thread:$0]  %s355, 512, %s357, [#allocation15], 128, 128, 8
        $region24: #{tpu_custom_call.1} parent=11 // pred_fallthru
          _
      $region12: #{tpu_custom_call.1} parent=5 // pred_fallthru
        _
      %p363 = scmp.lt.s32.totalorder %s29, 2
      // Predicated region
      $region25: #{tpu_custom_call.1} parent=5 // pred_check
        %p364 = pneg %p363
      $region26: #{tpu_custom_call.1} parent=5 // pred_check_branch
        %366 = sbr.rel (%p364) target = $region28
      $region27: #{tpu_custom_call.1} parent=5 // pred_region
        // Predicated region
        $region29: #{tpu_custom_call.1} parent=27 // pred_check
          %p367 = pneg %p72
        $region30: #{tpu_custom_call.1} parent=27 // pred_check_branch
          %369 = sbr.rel (%p367) target = $region32
        $region31: #{tpu_custom_call.1} parent=27 // pred_region
          %s370 = sand.u32 %s62, 1
          %s371 = scalar_lea.sflag [#allocation6], %s370
          %s372 = sand.u32 %s62, 1
          %s373 = smul.addr %s372, 8
          %s374 = scalar_lea.vmem [#allocation5], %s373
          %s376 = ssub.s32 128, 128
          %377 = vsyncadd %s371, %s376
          %s378 = sadd.s32 %s38, %s37
          %s379 = sadd.s32 %s378, %s36
          %s380 = smul.addr %s379, 128
          %s381 = scalar_lea.hbm %s0, %s380
          %s383 = sshll.u32 %s374, 4
          %s384 = int_to_ptr.vmem [resolvable:$true] %s383
          %386 = dma.hbm_to_vmem [thread:$0]  %s381, 128, %s384, %s371
        $region32: #{tpu_custom_call.1} parent=27 // pred_fallthru
          _
        // Predicated region
        $region33: #{tpu_custom_call.1} parent=27 // pred_check
          %p387 = pneg %p102
        $region34: #{tpu_custom_call.1} parent=27 // pred_check_branch
          %389 = sbr.rel (%p387) target = $region36
        $region35: #{tpu_custom_call.1} parent=27 // pred_region
          %s390 = sand.u32 %s29, 1
          %s391 = scalar_lea.sflag [#allocation9], %s390
          %s392 = sand.u32 %s92, 1
          %s393 = smul.addr %s392, 8
          %s394 = scalar_lea.vmem [#allocation8], %s393
          %s396 = ssub.s32 128, 128
          %397 = vsyncadd %s391, %s396
          %s398 = sadd.s32 %s38, %s37
          %s399 = sadd.s32 %s398, %s36
          %s400 = smul.addr %s399, 128
          %s401 = scalar_lea.hbm %s1, %s400
          %s403 = sshll.u32 %s394, 4
          %s404 = int_to_ptr.vmem [resolvable:$true] %s403
          %406 = dma.hbm_to_vmem [thread:$0]  %s401, 128, %s404, %s391
        $region36: #{tpu_custom_call.1} parent=27 // pred_fallthru
          _
        // Predicated region
        $region37: #{tpu_custom_call.1} parent=27 // pred_check
          %p407 = pneg %p132
        $region38: #{tpu_custom_call.1} parent=27 // pred_check_branch
          %409 = sbr.rel (%p407) target = $region40
        $region39: #{tpu_custom_call.1} parent=27 // pred_region
          %s410 = sand.u32 %s29, 1
          %s411 = scalar_lea.sflag [#allocation9], %s410
          %s412 = sand.u32 %s122, 1
          %s413 = smul.addr %s412, 8
          %s414 = scalar_lea.vmem [#allocation10], %s413
          %s416 = ssub.s32 128, 128
          %417 = vsyncadd %s411, %s416
          %s418 = sadd.s32 %s38, %s37
          %s419 = sadd.s32 %s418, %s36
          %s420 = smul.addr %s419, 128
          %s421 = scalar_lea.hbm %s2, %s420
          %s423 = sshll.u32 %s414, 4
          %s424 = int_to_ptr.vmem [resolvable:$true] %s423
          %426 = dma.hbm_to_vmem [thread:$0]  %s421, 128, %s424, %s411
        $region40: #{tpu_custom_call.1} parent=27 // pred_fallthru
          _
      $region28: #{tpu_custom_call.1} parent=5 // pred_fallthru
        _
      %p427 = scmp.le.s32.totalorder 1, %s29
      %p428 = scmp.lt.s32.totalorder %s29, 3
      %p429 = pnand %p427, %p428
      %p430 = pneg %p429
      // Predicated region
      $region41: #{tpu_custom_call.1} parent=5 // pred_check
        _
      $region42: #{tpu_custom_call.1} parent=5 // pred_check_branch
        %432 = sbr.rel (%p429) target = $region44
      $region43: #{tpu_custom_call.1} parent=5 // pred_region
        %s433 = ssub.s32 %s29, 1
        %s434 = sand.u32 %s65, 1
        %s435 = scalar_lea.sflag [#allocation6], %s434
        %s436 = sand.u32 %s65, 1
        %s437 = smul.addr %s436, 8
        %s438 = scalar_lea.vmem [#allocation5], %s437
        // Predicated region
        $region45: #{tpu_custom_call.1} parent=43 // pred_check
          %p439 = pneg %p78
        $region46: #{tpu_custom_call.1} parent=43 // pred_check_branch
          %441 = sbr.rel (%p439) target = $region48
        $region47: #{tpu_custom_call.1} parent=43 // pred_region
          %442 = dma.done %s435, 128
        $region48: #{tpu_custom_call.1} parent=43 // pred_fallthru
          _
        %s443 = sand.u32 %s34, 1
        %s444 = scalar_lea.sflag [#allocation9], %s443
        %s445 = sand.u32 %s95, 1
        %s446 = smul.addr %s445, 8
        %s447 = scalar_lea.vmem [#allocation8], %s446
        // Predicated region
        $region49: #{tpu_custom_call.1} parent=43 // pred_check
          %p448 = pneg %p108
        $region50: #{tpu_custom_call.1} parent=43 // pred_check_branch
          %450 = sbr.rel (%p448) target = $region52
        $region51: #{tpu_custom_call.1} parent=43 // pred_region
          %451 = dma.done %s444, 128
        $region52: #{tpu_custom_call.1} parent=43 // pred_fallthru
          _
        %s452 = sand.u32 %s34, 1
        %s453 = scalar_lea.sflag [#allocation9], %s452
        %s454 = sand.u32 %s125, 1
        %s455 = smul.addr %s454, 8
        %s456 = scalar_lea.vmem [#allocation10], %s455
        // Predicated region
        $region53: #{tpu_custom_call.1} parent=43 // pred_check
          %p457 = pneg %p138
        $region54: #{tpu_custom_call.1} parent=43 // pred_check_branch
          %459 = sbr.rel (%p457) target = $region56
        $region55: #{tpu_custom_call.1} parent=43 // pred_region
          %460 = dma.done %s453, 128
        $region56: #{tpu_custom_call.1} parent=43 // pred_fallthru
          _
        // Predicated region
        $region57: #{tpu_custom_call.1} parent=43 // pred_check
          %p461 = pneg %p164
        $region58: #{tpu_custom_call.1} parent=43 // pred_check_branch
          %463 = sbr.rel (%p461) target = $region60
        $region59: #{tpu_custom_call.1} parent=43 // pred_region
          %464 = dma.done [#allocation12], 512
        $region60: #{tpu_custom_call.1} parent=43 // pred_fallthru
          _
        // Predicated region
        $region61: #{tpu_custom_call.1} parent=43 // pred_check
          %p465 = pneg %p190
        $region62: #{tpu_custom_call.1} parent=43 // pred_check_branch
          %467 = sbr.rel (%p465) target = $region64
        $region63: #{tpu_custom_call.1} parent=43 // pred_region
          %468 = dma.done [#allocation12], 512
        $region64: #{tpu_custom_call.1} parent=43 // pred_fallthru
          _
        // Predicated region
        $region65: #{tpu_custom_call.1} parent=43 // pred_check
          %p469 = pneg %p216
        $region66: #{tpu_custom_call.1} parent=43 // pred_check_branch
          %471 = sbr.rel (%p469) target = $region68
        $region67: #{tpu_custom_call.1} parent=43 // pred_region
          %472 = dma.done [#allocation15], 512
        $region68: #{tpu_custom_call.1} parent=43 // pred_fallthru
          _
        %s473 = sand.u32 %s65, 1
        %s474 = scalar_lea.sflag [#allocation6], %s473
        %s475 = sand.u32 %s65, 1
        %s476 = smul.addr %s475, 8
        %s477 = scalar_lea.vmem [#allocation5], %s476
        %p478 = pneg %p78
        %p479 = pneg %p75
        %s480 = sand.u32 %s34, 1
        %s481 = scalar_lea.sflag [#allocation9], %s480
        %s482 = sand.u32 %s95, 1
        %s483 = smul.addr %s482, 8
        %s484 = scalar_lea.vmem [#allocation8], %s483
        %p485 = pneg %p108
        %p486 = pneg %p105
        %s487 = sand.u32 %s34, 1
        %s488 = scalar_lea.sflag [#allocation9], %s487
        %s489 = sand.u32 %s125, 1
        %s490 = smul.addr %s489, 8
        %s491 = scalar_lea.vmem [#allocation10], %s490
        %p492 = pneg %p138
        %p493 = pneg %p135
        %p494 = pneg %p164
        %p495 = pneg %p161
        %p496 = pneg %p190
        %p497 = pneg %p187
        %p498 = pneg %p216
        %p499 = pneg %p213
        %p500 = pneg %p244
        %p501 = pneg %p241
        %s502 = sand.u32 %s231, 1
        %s503 = scalar_lea.sflag [#allocation7], %s502
        %s504 = sand.u32 %s231, 1
        %s505 = smul.addr %s504, 32
        %s506 = scalar_lea.vmem [#allocation16], %s505
        %p507 = pneg %p272
        %p508 = pneg %p269
        %s509 = sand.u32 %s34, 1
        %s510 = scalar_lea.sflag [#allocation18], %s509
        %s511 = sand.u32 %s259, 1
        %s512 = smul.addr %s511, 32
        %s513 = scalar_lea.vmem [#allocation17], %s512
        %p514 = pneg %p300
        %p515 = pneg %p297
        %s516 = sand.u32 %s34, 1
        %s517 = scalar_lea.sflag [#allocation18], %s516
        %s518 = sand.u32 %s287, 1
        %s519 = smul.addr %s518, 32
        %s520 = scalar_lea.vmem [#allocation19], %s519
        %s521 = smul.u32 4, %s41
        %s522 = smul.u32 4, %s41
        %s523 = smul.u32 4, %s41
        %p524 = scmp.eq.s32.totalorder %s41, 0
        // Predicated region
        $region69: #{tpu_custom_call.1} parent=43 // pred_check
          %p525 = pneg %p524
        $region70: #{tpu_custom_call.1} parent=43 // pred_check_branch
          %527 = sbr.rel (%p525) target = $region72
        $region71: #{tpu_custom_call.1} parent=43 // pred_region
          %vm528 = vcmask 261120
          %529 = vst.msk [vmem:[#allocation2] sm:$0xff] %vm528, 0.0
          %530 = vst.msk [vmem:[#allocation3] sm:$0xff] %vm528, 0.0
          %531 = vst.msk [vmem:[#allocation4] sm:$0xff] %vm528, 0.0
        $region72: #{tpu_custom_call.1} parent=43 // pred_fallthru
          _
        %v532 = vld [vmem:[#allocation2] sm:$0xff]
        %v533 = vld [vmem:[%s438] sm:$0xff]
        %v534 = vld [vmem:[#allocation11] sm:$0xff]
        %v535 = vld [vmem:[#allocation11 + $0x8] sm:$0xff]
        %v536 = vld [vmem:[#allocation11 + $0x10] sm:$0xff]
        %v537 = vld [vmem:[#allocation11 + $0x18] sm:$0xff]
        %vm538 = vcmask 261120
        %v540 = vsel %vm538, %v533, 0
        %542 = vmatprep.subr.mxu0 0.0
        %543 = vmatpush1.msra.mxu0 %v534
        %544 = vmatprep.subr.mxu0 0.0
        %545 = vmatpush1.msra.mxu0 %v535
        %546 = vmatprep.subr.mxu0 0.0
        %547 = vmatpush1.msra.mxu0 %v536
        %548 = vmatprep.subr.mxu0 0.0
        %549 = vmatpush1.msra.mxu0 %v537
        %550 = vmatprep.subr.mxu0 0.0
        %551 = vmatpush1.msra.mxu0 0.0
        %552 = vmatprep.subr.mxu0 0.0
        %553 = vmatpush1.msra.mxu0 0.0
        %554 = vmatprep.subr.mxu0 0.0
        %555 = vmatpush1.msra.mxu0 0.0
        %556 = vmatprep.subr.mxu0 0.0
        %557 = vmatpush1.msra.mxu0 0.0
        %558 = vmatprep.subr.mxu0 0.0
        %559 = vmatpush1.msra.mxu0 0.0
        %560 = vmatprep.subr.mxu0 0.0
        %561 = vmatpush1.msra.mxu0 0.0
        %562 = vmatprep.subr.mxu0 0.0
        %563 = vmatpush1.msra.mxu0 0.0
        %564 = vmatprep.subr.mxu0 0.0
        %565 = vmatpush1.msra.mxu0 0.0
        %566 = vmatprep.subr.mxu0 0.0
        %567 = vmatpush1.msra.mxu0 0.0
        %568 = vmatprep.subr.mxu0 0.0
        %569 = vmatpush1.msra.mxu0 0.0
        %570 = vmatprep.subr.mxu0 0.0
        %571 = vmatpush1.msra.mxu0 0.0
        %572 = vmatprep.subr.mxu0 0.0
        %573 = vmatpush1.msra.mxu0 0.0
        %574 = vmatprep.subr.mxu0 0.0
        %575 = vmatpush1.msra.mxu0 0.0
        %576 = vmatprep.subr.mxu0 0.0
        %577 = vmatpush1.msra.mxu0 0.0
        %578 = vmatprep.subr.mxu0 0.0
        %579 = vmatpush1.msra.mxu0 0.0
        %580 = vmatprep.subr.mxu0 0.0
        %581 = vmatpush1.msra.mxu0 0.0
        %582 = vmatprep.subr.mxu0 0.0
        %583 = vmatpush1.msra.mxu0 0.0
        %584 = vmatprep.subr.mxu0 0.0
        %585 = vmatpush1.msra.mxu0 0.0
        %586 = vmatprep.subr.mxu0 0.0
        %587 = vmatpush1.msra.mxu0 0.0
        %588 = vmatprep.subr.mxu0 0.0
        %589 = vmatpush1.msra.mxu0 0.0
        %590 = vmatprep.subr.mxu0 0.0
        %591 = vmatpush1.msra.mxu0 0.0
        %592 = vmatprep.subr.mxu0 0.0
        %593 = vmatpush1.msra.mxu0 0.0
        %594 = vmatprep.subr.mxu0 0.0
        %595 = vmatpush1.msra.mxu0 0.0
        %596 = vmatprep.subr.mxu0 0.0
        %597 = vmatpush1.msra.mxu0 0.0
        %598 = vmatprep.subr.mxu0 0.0
        %599 = vmatpush1.msra.mxu0 0.0
        %600 = vmatprep.subr.mxu0 0.0
        %601 = vmatpush1.msra.mxu0 0.0
        %602 = vmatprep.subr.mxu0 0.0
        %603 = vmatpush1.msra.mxu0 0.0
        %604 = vmatprep.subr.mxu0 0.0
        %605 = vmatpush1.msra.mxu0 0.0
        %606 = vmatprep.mubr.f32.mxu0 0.0
        %607 = vmatmul.mubr.f32.gmra.mrb[0].mxu0 %v540
        %v608 = vpop.f32.mrb[0].mxu0
        %v609 = vadd.f32 0.0, %v608
        %v610 = vpop.f32.mrb[0].mxu0
        %611 = vdwg.mxu0
        %v612 = vadd.f32 %v532, %v609
        %613 = vst.msk [vmem:[#allocation2] sm:$0xff] %vm538, %v612
        %v614 = vld [vmem:[#allocation3] sm:$0xff]
        %v615 = vld [vmem:[%s447] sm:$0xff]
        %v616 = vld [vmem:[#allocation13] sm:$0xff]
        %v617 = vld [vmem:[#allocation13 + $0x8] sm:$0xff]
        %v618 = vld [vmem:[#allocation13 + $0x10] sm:$0xff]
        %v619 = vld [vmem:[#allocation13 + $0x18] sm:$0xff]
        %v621 = vsel %vm538, %v615, 0
        %623 = vmatprep.subr.mxu0 0.0
        %624 = vmatpush1.msra.mxu0 %v616
        %625 = vmatprep.subr.mxu0 0.0
        %626 = vmatpush1.msra.mxu0 %v617
        %627 = vmatprep.subr.mxu0 0.0
        %628 = vmatpush1.msra.mxu0 %v618
        %629 = vmatprep.subr.mxu0 0.0
        %630 = vmatpush1.msra.mxu0 %v619
        %631 = vmatprep.subr.mxu0 0.0
        %632 = vmatpush1.msra.mxu0 0.0
        %633 = vmatprep.subr.mxu0 0.0
        %634 = vmatpush1.msra.mxu0 0.0
        %635 = vmatprep.subr.mxu0 0.0
        %636 = vmatpush1.msra.mxu0 0.0
        %637 = vmatprep.subr.mxu0 0.0
        %638 = vmatpush1.msra.mxu0 0.0
        %639 = vmatprep.subr.mxu0 0.0
        %640 = vmatpush1.msra.mxu0 0.0
        %641 = vmatprep.subr.mxu0 0.0
        %642 = vmatpush1.msra.mxu0 0.0
        %643 = vmatprep.subr.mxu0 0.0
        %644 = vmatpush1.msra.mxu0 0.0
        %645 = vmatprep.subr.mxu0 0.0
        %646 = vmatpush1.msra.mxu0 0.0
        %647 = vmatprep.subr.mxu0 0.0
        %648 = vmatpush1.msra.mxu0 0.0
        %649 = vmatprep.subr.mxu0 0.0
        %650 = vmatpush1.msra.mxu0 0.0
        %651 = vmatprep.subr.mxu0 0.0
        %652 = vmatpush1.msra.mxu0 0.0
        %653 = vmatprep.subr.mxu0 0.0
        %654 = vmatpush1.msra.mxu0 0.0
        %655 = vmatprep.subr.mxu0 0.0
        %656 = vmatpush1.msra.mxu0 0.0
        %657 = vmatprep.subr.mxu0 0.0
        %658 = vmatpush1.msra.mxu0 0.0
        %659 = vmatprep.subr.mxu0 0.0
        %660 = vmatpush1.msra.mxu0 0.0
        %661 = vmatprep.subr.mxu0 0.0
        %662 = vmatpush1.msra.mxu0 0.0
        %663 = vmatprep.subr.mxu0 0.0
        %664 = vmatpush1.msra.mxu0 0.0
        %665 = vmatprep.subr.mxu0 0.0
        %666 = vmatpush1.msra.mxu0 0.0
        %667 = vmatprep.subr.mxu0 0.0
        %668 = vmatpush1.msra.mxu0 0.0
        %669 = vmatprep.subr.mxu0 0.0
        %670 = vmatpush1.msra.mxu0 0.0
        %671 = vmatprep.subr.mxu0 0.0
        %672 = vmatpush1.msra.mxu0 0.0
        %673 = vmatprep.subr.mxu0 0.0
        %674 = vmatpush1.msra.mxu0 0.0
        %675 = vmatprep.subr.mxu0 0.0
        %676 = vmatpush1.msra.mxu0 0.0
        %677 = vmatprep.subr.mxu0 0.0
        %678 = vmatpush1.msra.mxu0 0.0
        %679 = vmatprep.subr.mxu0 0.0
        %680 = vmatpush1.msra.mxu0 0.0
        %681 = vmatprep.subr.mxu0 0.0
        %682 = vmatpush1.msra.mxu0 0.0
        %683 = vmatprep.subr.mxu0 0.0
        %684 = vmatpush1.msra.mxu0 0.0
        %685 = vmatprep.subr.mxu0 0.0
        %686 = vmatpush1.msra.mxu0 0.0
        %687 = vmatprep.mubr.f32.mxu0 0.0
        %688 = vmatmul.mubr.f32.gmra.mrb[0].mxu0 %v621
        %v689 = vpop.f32.mrb[0].mxu0
        %v690 = vadd.f32 0.0, %v689
        %v691 = vpop.f32.mrb[0].mxu0
        %692 = vdwg.mxu0
        %v693 = vadd.f32 %v614, %v690
        %694 = vst.msk [vmem:[#allocation3] sm:$0xff] %vm538, %v693
        %v695 = vld [vmem:[#allocation4] sm:$0xff]
        %v696 = vld [vmem:[%s456] sm:$0xff]
        %v697 = vld [vmem:[#allocation14] sm:$0xff]
        %v698 = vld [vmem:[#allocation14 + $0x8] sm:$0xff]
        %v699 = vld [vmem:[#allocation14 + $0x10] sm:$0xff]
        %v700 = vld [vmem:[#allocation14 + $0x18] sm:$0xff]
        %v702 = vsel %vm538, %v696, 0
        %704 = vmatprep.subr.mxu0 0.0
        %705 = vmatpush1.msra.mxu0 %v697
        %706 = vmatprep.subr.mxu0 0.0
        %707 = vmatpush1.msra.mxu0 %v698
        %708 = vmatprep.subr.mxu0 0.0
        %709 = vmatpush1.msra.mxu0 %v699
        %710 = vmatprep.subr.mxu0 0.0
        %711 = vmatpush1.msra.mxu0 %v700
        %712 = vmatprep.subr.mxu0 0.0
        %713 = vmatpush1.msra.mxu0 0.0
        %714 = vmatprep.subr.mxu0 0.0
        %715 = vmatpush1.msra.mxu0 0.0
        %716 = vmatprep.subr.mxu0 0.0
        %717 = vmatpush1.msra.mxu0 0.0
        %718 = vmatprep.subr.mxu0 0.0
        %719 = vmatpush1.msra.mxu0 0.0
        %720 = vmatprep.subr.mxu0 0.0
        %721 = vmatpush1.msra.mxu0 0.0
        %722 = vmatprep.subr.mxu0 0.0
        %723 = vmatpush1.msra.mxu0 0.0
        %724 = vmatprep.subr.mxu0 0.0
        %725 = vmatpush1.msra.mxu0 0.0
        %726 = vmatprep.subr.mxu0 0.0
        %727 = vmatpush1.msra.mxu0 0.0
        %728 = vmatprep.subr.mxu0 0.0
        %729 = vmatpush1.msra.mxu0 0.0
        %730 = vmatprep.subr.mxu0 0.0
        %731 = vmatpush1.msra.mxu0 0.0
        %732 = vmatprep.subr.mxu0 0.0
        %733 = vmatpush1.msra.mxu0 0.0
        %734 = vmatprep.subr.mxu0 0.0
        %735 = vmatpush1.msra.mxu0 0.0
        %736 = vmatprep.subr.mxu0 0.0
        %737 = vmatpush1.msra.mxu0 0.0
        %738 = vmatprep.subr.mxu0 0.0
        %739 = vmatpush1.msra.mxu0 0.0
        %740 = vmatprep.subr.mxu0 0.0
        %741 = vmatpush1.msra.mxu0 0.0
        %742 = vmatprep.subr.mxu0 0.0
        %743 = vmatpush1.msra.mxu0 0.0
        %744 = vmatprep.subr.mxu0 0.0
        %745 = vmatpush1.msra.mxu0 0.0
        %746 = vmatprep.subr.mxu0 0.0
        %747 = vmatpush1.msra.mxu0 0.0
        %748 = vmatprep.subr.mxu0 0.0
        %749 = vmatpush1.msra.mxu0 0.0
        %750 = vmatprep.subr.mxu0 0.0
        %751 = vmatpush1.msra.mxu0 0.0
        %752 = vmatprep.subr.mxu0 0.0
        %753 = vmatpush1.msra.mxu0 0.0
        %754 = vmatprep.subr.mxu0 0.0
        %755 = vmatpush1.msra.mxu0 0.0
        %756 = vmatprep.subr.mxu0 0.0
        %757 = vmatpush1.msra.mxu0 0.0
        %758 = vmatprep.subr.mxu0 0.0
        %759 = vmatpush1.msra.mxu0 0.0
        %760 = vmatprep.subr.mxu0 0.0
        %761 = vmatpush1.msra.mxu0 0.0
        %762 = vmatprep.subr.mxu0 0.0
        %763 = vmatpush1.msra.mxu0 0.0
        %764 = vmatprep.subr.mxu0 0.0
        %765 = vmatpush1.msra.mxu0 0.0
        %766 = vmatprep.subr.mxu0 0.0
        %767 = vmatpush1.msra.mxu0 0.0
        %768 = vmatprep.mubr.f32.mxu0 0.0
        %769 = vmatmul.mubr.f32.gmra.mrb[0].mxu0 %v702
        %v770 = vpop.f32.mrb[0].mxu0
        %v771 = vadd.f32 0.0, %v770
        %v772 = vpop.f32.mrb[0].mxu0
        %773 = vdwg.mxu0
        %v774 = vadd.f32 %v695, %v771
        %775 = vst.msk [vmem:[#allocation4] sm:$0xff] %vm538, %v774
        // Predicated region
        $region73: #{tpu_custom_call.1} parent=43 // pred_check
          %p776 = pneg %p524
        $region74: #{tpu_custom_call.1} parent=43 // pred_check_branch
          %778 = sbr.rel (%p776) target = $region76
        $region75: #{tpu_custom_call.1} parent=43 // pred_region
          %v779 = vld [vmem:[#allocation2] sm:$0xff]
          %v780 = vld [vmem:[#allocation3] sm:$0xff]
          %v781 = vld [vmem:[#allocation4] sm:$0xff]
          %vm782 = vcmask 64512
          %783 = vst.msk [vmem:[%s506] sm:$0xff] %vm782, %v779
          %784 = vxpose.xlu0.b32.start [1/16] %v780, 128
          %785 = vxpose.xlu0.b32.cont [2/16] 0.0, 128
          %786 = vxpose.xlu0.b32.cont [3/16] 0.0, 128
          %787 = vxpose.xlu0.b32.cont [4/16] 0.0, 128
          %788 = vxpose.xlu0.b32.cont [5/16] 0.0, 128
          %789 = vxpose.xlu0.b32.cont [6/16] 0.0, 128
          %790 = vxpose.xlu0.b32.cont [7/16] 0.0, 128
          %791 = vxpose.xlu0.b32.cont [8/16] 0.0, 128
          %792 = vxpose.xlu0.b32.cont [9/16] 0.0, 128
          %793 = vxpose.xlu0.b32.cont [10/16] 0.0, 128
          %794 = vxpose.xlu0.b32.cont [11/16] 0.0, 128
          %795 = vxpose.xlu0.b32.cont [12/16] 0.0, 128
          %796 = vxpose.xlu0.b32.cont [13/16] 0.0, 128
          %797 = vxpose.xlu0.b32.cont [14/16] 0.0, 128
          %798 = vxpose.xlu0.b32.cont [15/16] 0.0, 128
          %799 = vxpose.xlu0.b32.end [16/16] 0.0, 128
          %v800 = vpop.trf.xlu0
          %v801 = vpop.trf.xlu0
          %v802 = vpop.trf.xlu0
          %v803 = vpop.trf.xlu0
          %v804 = vpop.trf.xlu0
          %v805 = vpop.trf.xlu0
          %v806 = vpop.trf.xlu0
          %v807 = vpop.trf.xlu0
          %v808 = vpop.trf.xlu0
          %v809 = vpop.trf.xlu0
          %v810 = vpop.trf.xlu0
          %v811 = vpop.trf.xlu0
          %v812 = vpop.trf.xlu0
          %v813 = vpop.trf.xlu0
          %v814 = vpop.trf.xlu0
          %v815 = vpop.trf.xlu0
          %816 = vst.msk [vmem:[%s513] sm:$0xff] %vm782, %v800
          %817 = vst.msk [vmem:[%s520] sm:$0xff] %vm782, %v781
          %819 = vrot.lane.b32.xlu0 %v779, 120
          %v820 = vpop.permute.xlu0 %819
          %s822 = scalar_lea.vmem %s506, 8 [#allocation16]
          %823 = vst.msk [vmem:[%s822] sm:$0xff] %vm782, %v820
          %825 = vrot.lane.b32.xlu0 %v780, 120
          %v826 = vpop.permute.xlu0 %825
          %828 = vxpose.xlu0.b32.start [1/16] %v826, 128
          %829 = vxpose.xlu0.b32.cont [2/16] 0.0, 128
          %830 = vxpose.xlu0.b32.cont [3/16] 0.0, 128
          %831 = vxpose.xlu0.b32.cont [4/16] 0.0, 128
          %832 = vxpose.xlu0.b32.cont [5/16] 0.0, 128
          %833 = vxpose.xlu0.b32.cont [6/16] 0.0, 128
          %834 = vxpose.xlu0.b32.cont [7/16] 0.0, 128
          %835 = vxpose.xlu0.b32.cont [8/16] 0.0, 128
          %836 = vxpose.xlu0.b32.cont [9/16] 0.0, 128
          %837 = vxpose.xlu0.b32.cont [10/16] 0.0, 128
          %838 = vxpose.xlu0.b32.cont [11/16] 0.0, 128
          %839 = vxpose.xlu0.b32.cont [12/16] 0.0, 128
          %840 = vxpose.xlu0.b32.cont [13/16] 0.0, 128
          %841 = vxpose.xlu0.b32.cont [14/16] 0.0, 128
          %842 = vxpose.xlu0.b32.cont [15/16] 0.0, 128
          %843 = vxpose.xlu0.b32.end [16/16] 0.0, 128
          %v844 = vpop.trf.xlu0
          %v845 = vpop.trf.xlu0
          %v846 = vpop.trf.xlu0
          %v847 = vpop.trf.xlu0
          %v848 = vpop.trf.xlu0
          %v849 = vpop.trf.xlu0
          %v850 = vpop.trf.xlu0
          %v851 = vpop.trf.xlu0
          %v852 = vpop.trf.xlu0
          %v853 = vpop.trf.xlu0
          %v854 = vpop.trf.xlu0
          %v855 = vpop.trf.xlu0
          %v856 = vpop.trf.xlu0
          %v857 = vpop.trf.xlu0
          %v858 = vpop.trf.xlu0
          %v859 = vpop.trf.xlu0
          %s860 = scalar_lea.vmem %s513, 8 [#allocation17]
          %861 = vst.msk [vmem:[%s860] sm:$0xff] %vm782, %v844
          %863 = vrot.lane.b32.xlu0 %v781, 120
          %v864 = vpop.permute.xlu0 %863
          %s866 = scalar_lea.vmem %s520, 8 [#allocation19]
          %867 = vst.msk [vmem:[%s866] sm:$0xff] %vm782, %v864
          %868 = vrot.lane.b32.xlu0 %v779, 112
          %v869 = vpop.permute.xlu0 %868
          %s871 = scalar_lea.vmem %s506, 16 [#allocation16]
          %872 = vst.msk [vmem:[%s871] sm:$0xff] %vm782, %v869
          %873 = vrot.lane.b32.xlu0 %v780, 112
          %v874 = vpop.permute.xlu0 %873
          %876 = vxpose.xlu0.b32.start [1/16] %v874, 128
          %877 = vxpose.xlu0.b32.cont [2/16] 0.0, 128
          %878 = vxpose.xlu0.b32.cont [3/16] 0.0, 128
          %879 = vxpose.xlu0.b32.cont [4/16] 0.0, 128
          %880 = vxpose.xlu0.b32.cont [5/16] 0.0, 128
          %881 = vxpose.xlu0.b32.cont [6/16] 0.0, 128
          %882 = vxpose.xlu0.b32.cont [7/16] 0.0, 128
          %883 = vxpose.xlu0.b32.cont [8/16] 0.0, 128
          %884 = vxpose.xlu0.b32.cont [9/16] 0.0, 128
          %885 = vxpose.xlu0.b32.cont [10/16] 0.0, 128
          %886 = vxpose.xlu0.b32.cont [11/16] 0.0, 128
          %887 = vxpose.xlu0.b32.cont [12/16] 0.0, 128
          %888 = vxpose.xlu0.b32.cont [13/16] 0.0, 128
          %889 = vxpose.xlu0.b32.cont [14/16] 0.0, 128
          %890 = vxpose.xlu0.b32.cont [15/16] 0.0, 128
          %891 = vxpose.xlu0.b32.end [16/16] 0.0, 128
          %v892 = vpop.trf.xlu0
          %v893 = vpop.trf.xlu0
          %v894 = vpop.trf.xlu0
          %v895 = vpop.trf.xlu0
          %v896 = vpop.trf.xlu0
          %v897 = vpop.trf.xlu0
          %v898 = vpop.trf.xlu0
          %v899 = vpop.trf.xlu0
          %v900 = vpop.trf.xlu0
          %v901 = vpop.trf.xlu0
          %v902 = vpop.trf.xlu0
          %v903 = vpop.trf.xlu0
          %v904 = vpop.trf.xlu0
          %v905 = vpop.trf.xlu0
          %v906 = vpop.trf.xlu0
          %v907 = vpop.trf.xlu0
          %s908 = scalar_lea.vmem %s513, 16 [#allocation17]
          %909 = vst.msk [vmem:[%s908] sm:$0xff] %vm782, %v892
          %910 = vrot.lane.b32.xlu0 %v781, 112
          %v911 = vpop.permute.xlu0 %910
          %s913 = scalar_lea.vmem %s520, 16 [#allocation19]
          %914 = vst.msk [vmem:[%s913] sm:$0xff] %vm782, %v911
          %915 = vrot.lane.b32.xlu0 %v779, 104
          %v916 = vpop.permute.xlu0 %915
          %s918 = scalar_lea.vmem %s506, 24 [#allocation16]
          %919 = vst.msk [vmem:[%s918] sm:$0xff] %vm782, %v916
          %920 = vrot.lane.b32.xlu0 %v780, 104
          %v921 = vpop.permute.xlu0 %920
          %923 = vxpose.xlu0.b32.start [1/16] %v921, 128
          %924 = vxpose.xlu0.b32.cont [2/16] 0.0, 128
          %925 = vxpose.xlu0.b32.cont [3/16] 0.0, 128
          %926 = vxpose.xlu0.b32.cont [4/16] 0.0, 128
          %927 = vxpose.xlu0.b32.cont [5/16] 0.0, 128
          %928 = vxpose.xlu0.b32.cont [6/16] 0.0, 128
          %929 = vxpose.xlu0.b32.cont [7/16] 0.0, 128
          %930 = vxpose.xlu0.b32.cont [8/16] 0.0, 128
          %931 = vxpose.xlu0.b32.cont [9/16] 0.0, 128
          %932 = vxpose.xlu0.b32.cont [10/16] 0.0, 128
          %933 = vxpose.xlu0.b32.cont [11/16] 0.0, 128
          %934 = vxpose.xlu0.b32.cont [12/16] 0.0, 128
          %935 = vxpose.xlu0.b32.cont [13/16] 0.0, 128
          %936 = vxpose.xlu0.b32.cont [14/16] 0.0, 128
          %937 = vxpose.xlu0.b32.cont [15/16] 0.0, 128
          %938 = vxpose.xlu0.b32.end [16/16] 0.0, 128
          %v939 = vpop.trf.xlu0
          %v940 = vpop.trf.xlu0
          %v941 = vpop.trf.xlu0
          %v942 = vpop.trf.xlu0
          %v943 = vpop.trf.xlu0
          %v944 = vpop.trf.xlu0
          %v945 = vpop.trf.xlu0
          %v946 = vpop.trf.xlu0
          %v947 = vpop.trf.xlu0
          %v948 = vpop.trf.xlu0
          %v949 = vpop.trf.xlu0
          %v950 = vpop.trf.xlu0
          %v951 = vpop.trf.xlu0
          %v952 = vpop.trf.xlu0
          %v953 = vpop.trf.xlu0
          %v954 = vpop.trf.xlu0
          %s955 = scalar_lea.vmem %s513, 24 [#allocation17]
          %956 = vst.msk [vmem:[%s955] sm:$0xff] %vm782, %v939
          %957 = vrot.lane.b32.xlu0 %v781, 104
          %v958 = vpop.permute.xlu0 %957
          %s960 = scalar_lea.vmem %s520, 24 [#allocation19]
          %961 = vst.msk [vmem:[%s960] sm:$0xff] %vm782, %v958
        $region76: #{tpu_custom_call.1} parent=43 // pred_fallthru
          _
        %s962 = sand.u32 %s231, 1
        %s963 = scalar_lea.sflag [#allocation7], %s962
        %s964 = sand.u32 %s231, 1
        %s965 = smul.addr %s964, 32
        %s966 = scalar_lea.vmem [#allocation16], %s965
        %s967 = sand.u32 %s34, 1
        %s968 = scalar_lea.sflag [#allocation18], %s967
        %s969 = sand.u32 %s259, 1
        %s970 = smul.addr %s969, 32
        %s971 = scalar_lea.vmem [#allocation17], %s970
        %s972 = sand.u32 %s34, 1
        %s973 = scalar_lea.sflag [#allocation18], %s972
        %s974 = sand.u32 %s287, 1
        %s975 = smul.addr %s974, 32
        %s976 = scalar_lea.vmem [#allocation19], %s975
        // Predicated region
        $region77: #{tpu_custom_call.1} parent=43 // pred_check
          %p977 = pneg %p241
        $region78: #{tpu_custom_call.1} parent=43 // pred_check_branch
          %979 = sbr.rel (%p977) target = $region80
        $region79: #{tpu_custom_call.1} parent=43 // pred_region
          %s981 = ssub.s32 512, 512
          %982 = vsyncadd %s963, %s981
          %s983 = smul.addr %s39, 4
          %s984 = sadd.s32 %s40, %s983
          %s985 = smul.addr %s984, 128
          %s986 = scalar_lea.hbm %s6, %s985
          %s987 = sshll.u32 %s966, 4
          %s988 = int_to_ptr.vmem [resolvable:$true] %s987
          %993 = dma.vmem_to_hbm [thread:$0]  %s988, 512, %s986, %s963, 128, 128, 8
        $region80: #{tpu_custom_call.1} parent=43 // pred_fallthru
          _
        // Predicated region
        $region81: #{tpu_custom_call.1} parent=43 // pred_check
          %p994 = pneg %p269
        $region82: #{tpu_custom_call.1} parent=43 // pred_check_branch
          %996 = sbr.rel (%p994) target = $region84
        $region83: #{tpu_custom_call.1} parent=43 // pred_region
          %s998 = ssub.s32 512, 512
          %999 = vsyncadd %s968, %s998
          %s1000 = smul.addr %s39, 4
          %s1001 = sadd.s32 %s40, %s1000
          %s1002 = smul.addr %s1001, 128
          %s1003 = scalar_lea.hbm %s7, %s1002
          %s1004 = sshll.u32 %s971, 4
          %s1005 = int_to_ptr.vmem [resolvable:$true] %s1004
          %1010 = dma.vmem_to_hbm [thread:$0]  %s1005, 512, %s1003, %s968, 128, 128, 8
        $region84: #{tpu_custom_call.1} parent=43 // pred_fallthru
          _
        // Predicated region
        $region85: #{tpu_custom_call.1} parent=43 // pred_check
          %p1011 = pneg %p297
        $region86: #{tpu_custom_call.1} parent=43 // pred_check_branch
          %1013 = sbr.rel (%p1011) target = $region88
        $region87: #{tpu_custom_call.1} parent=43 // pred_region
          %s1015 = ssub.s32 512, 512
          %1016 = vsyncadd %s973, %s1015
          %s1017 = smul.addr %s39, 4
          %s1018 = sadd.s32 %s40, %s1017
          %s1019 = smul.addr %s1018, 128
          %s1020 = scalar_lea.hbm %s8, %s1019
          %s1021 = sshll.u32 %s976, 4
          %s1022 = int_to_ptr.vmem [resolvable:$true] %s1021
          %1027 = dma.vmem_to_hbm [thread:$0]  %s1022, 512, %s1020, %s973, 128, 128, 8
        $region88: #{tpu_custom_call.1} parent=43 // pred_fallthru
          _
      $region44: #{tpu_custom_call.1} parent=5 // pred_fallthru
        _
      %p1028 = scmp.le.s32.totalorder 2, %s29
      // Predicated region
      $region89: #{tpu_custom_call.1} parent=5 // pred_check
        %p1029 = pneg %p1028
      $region90: #{tpu_custom_call.1} parent=5 // pred_check_branch
        %1031 = sbr.rel (%p1029) target = $region92
      $region91: #{tpu_custom_call.1} parent=5 // pred_region
        %s1032 = ssub.s32 %s29, 2
        // Predicated region
        $region93: #{tpu_custom_call.1} parent=91 // pred_check
          %p1033 = pneg %p247
        $region94: #{tpu_custom_call.1} parent=91 // pred_check_branch
          %1035 = sbr.rel (%p1033) target = $region96
        $region95: #{tpu_custom_call.1} parent=91 // pred_region
          %s1036 = sand.u32 %s232, 1
          %s1037 = scalar_lea.sflag [#allocation7], %s1036
          %s1038 = sand.u32 %s232, 1
          %s1039 = smul.addr %s1038, 32
          %s1040 = scalar_lea.vmem [#allocation16], %s1039
          %1041 = dma.done %s1037, 512
        $region96: #{tpu_custom_call.1} parent=91 // pred_fallthru
          _
        // Predicated region
        $region97: #{tpu_custom_call.1} parent=91 // pred_check
          %p1042 = pneg %p275
        $region98: #{tpu_custom_call.1} parent=91 // pred_check_branch
          %1044 = sbr.rel (%p1042) target = $region100
        $region99: #{tpu_custom_call.1} parent=91 // pred_region
          %s1045 = sand.u32 %s35, 1
          %s1046 = scalar_lea.sflag [#allocation18], %s1045
          %s1047 = sand.u32 %s260, 1
          %s1048 = smul.addr %s1047, 32
          %s1049 = scalar_lea.vmem [#allocation17], %s1048
          %1050 = dma.done %s1046, 512
        $region100: #{tpu_custom_call.1} parent=91 // pred_fallthru
          _
        // Predicated region
        $region101: #{tpu_custom_call.1} parent=91 // pred_check
          %p1051 = pneg %p303
        $region102: #{tpu_custom_call.1} parent=91 // pred_check_branch
          %1053 = sbr.rel (%p1051) target = $region104
        $region103: #{tpu_custom_call.1} parent=91 // pred_region
          %s1054 = sand.u32 %s35, 1
          %s1055 = scalar_lea.sflag [#allocation18], %s1054
          %s1056 = sand.u32 %s288, 1
          %s1057 = smul.addr %s1056, 32
          %s1058 = scalar_lea.vmem [#allocation19], %s1057
          %1059 = dma.done %s1055, 512
        $region104: #{tpu_custom_call.1} parent=91 // pred_fallthru
          _
      $region92: #{tpu_custom_call.1} parent=5 // pred_fallthru
        _
    $region6: #{tpu_custom_call.1} parent=1 // loop_footer
      %s33 = sadd.s32 1, %s29
    $region7: #{tpu_custom_call.1} parent=1 // loop_footer_branch
      %28 = sbr.rel target = $region3
    $region8: #{tpu_custom_call.1} parent=1 // loop_exit
      _
    %1060 = vsyncpa [#allocation6], 1
    %s1061 = scalar_lea.sflag [#allocation6], 1
    %1062 = vsyncpa %s1061, 1
    %1063 = vsyncpa [#allocation9], 1
    %s1064 = scalar_lea.sflag [#allocation9], 1
    %1065 = vsyncpa %s1064, 1
    %1066 = vsyncpa [#allocation12], 1
    %1067 = vsyncpa [#allocation15], 1
    %1068 = vsyncpa [#allocation7], 1
    %s1069 = scalar_lea.sflag [#allocation7], 1
    %1070 = vsyncpa %s1069, 1
    %1071 = vsyncpa [#allocation18], 1
    %s1072 = scalar_lea.sflag [#allocation18], 1
    %1073 = vsyncpa %s1072, 1

</llo_original>
